<compile_context>
chip_gen: v5e
topology: v5e:2x2
jax: 0.10.0
libtpu: 0.0.40
codegen_flags: <defaults>
</compile_context>

<pallas_src>
import jax
import jax.numpy as jnp
import numpy as np
from jax import lax
from jax.experimental import pallas as pl
from jax.experimental.pallas import tpu as pltpu


_VMEM_SPEC = pl.BlockSpec(memory_space=pltpu.MemorySpace.VMEM)
_LANE_TARGET = 1024   # per-step GEMM lane target (review: >=512; larger also
                      # amortizes the ~0.35us/grid-step overhead at big batch)


# ------------------------------ Pallas kernels -------------------------------

def _conv_tanh_kernel(p_ref, w_ref, b_ref, o_ref):
    """Fused Conv2d (GEMM over im2col patches) + bias + Tanh.

    p_ref : (K, B*Pp)    lane-concatenated patches of B images
                         (K = Cin*KH*KW contraction dim, Pp = Ho*Wo padded to 128)
    w_ref : (Cout, K)    OIHW-flattened conv weights
    b_ref : (Cout, 1)    bias, broadcast over lanes
    o_ref : (Cout, B*Pp) pre-pool activations, channel-major, lane-dense
    """
    o_ref[...] = jnp.tanh(
        jnp.dot(w_ref[...], p_ref[...], preferred_element_type=jnp.float32)
        + b_ref[...])


def _classifier_kernel(x_ref, w1_ref, b1_ref, w2_ref, b2_ref, w3_ref, b3_ref,
                       o_ref):
    """Fused 3-layer MLP: tanh(tanh(x@W1+b1)@W2+b2)@W3+b3, all in VMEM."""
    h = jnp.tanh(jnp.dot(x_ref[...], w1_ref[...],
                         preferred_element_type=jnp.float32) + b1_ref[...])
    h = jnp.tanh(jnp.dot(h, w2_ref[...],
                         preferred_element_type=jnp.float32) + b2_ref[...])
    o_ref[...] = jnp.dot(h, w3_ref[...],
                         preferred_element_type=jnp.float32) + b3_ref[...]


# ------------------------------- wrapper glue ---------------------------------

def _round_up(x, m):
    return (x + m - 1) // m * m


def _pick_batch_block(n, padded_p):
    """Images per grid step.

    Targets >= _LANE_TARGET output lanes per step when the batch allows, keeps
    >=2 grid steps when N >= 2 (v7x: 2 TensorCores are fed only by the parallel
    batch axis), and caps at 16 images/step so the double-buffered patch block
    stays small on v5e's 16 MiB default scoped VMEM.
    """
    target = -(-_LANE_TARGET // padded_p)                 # cdiv
    limit = max(1, min(target, 16, max(1, n // 2)))
    b = 1
    for d in range(1, limit + 1):                         # largest divisor of n
        if n % d == 0:
            b = d
    return b


def _conv_tanh(patches, w_mat, b_col, pp, block_b):
    """pallas_call: patches (K, N*Pp) -> tanh(W @ patches + b), (Cout, N*Pp)."""
    k, total = patches.shape
    n = total // pp
    cout = w_mat.shape[0]
    lanes = block_b * pp                                  # multiple of 128
    return pl.pallas_call(
        _conv_tanh_kernel,
        out_shape=jax.ShapeDtypeStruct((cout, total), jnp.float32),
        grid=(n // block_b,),
        in_specs=[
            pl.BlockSpec((k, lanes), lambda i: (0, i)),
            pl.BlockSpec((cout, k), lambda i: (0, 0)),
            pl.BlockSpec((cout, 1), lambda i: (0, 0)),
        ],
        out_specs=pl.BlockSpec((cout, lanes), lambda i: (0, i)),
        compiler_params=pltpu.CompilerParams(
            dimension_semantics=("parallel",)),
    )(patches, w_mat, b_col)


def _conv_tanh_pool_stage(x, lhs_spec, w_mat, b_col, kh, kw, padding):
    """One LeNet feature stage: Conv2d(+bias)+Tanh (Pallas) then 2x2 avg-pool.

    x        : input in `lhs_spec` layout ("NCHW" for the image, "CNHW" after)
    returns  : (Cout, N, Ho/2, Wo/2) channel-major pooled activations
    """
    cout = w_mat.shape[0]
    # Identity-kernel conv extracts patches in (ci, kh, kw) channel-major order,
    # matching the OIHW (Cout, Cin*KH*KW) weight reshape; "CNHW" out spec lands
    # them already K-major so no transpose is needed.
    pat = lax.conv_general_dilated_patches(
        x, (kh, kw), (1, 1), [(padding, padding), (padding, padding)],
        dimension_numbers=(lhs_spec, "OIHW", "CNHW"))      # (K, N, Ho, Wo)
    k, n, ho, wo = pat.shape
    assert ho % 2 == 0 and wo % 2 == 0, "2x2 avg-pool requires even Ho/Wo"
    p = ho * wo
    pp = _round_up(p, 128)          # lane-pad so every kernel store is unmasked
    pat = pat.reshape(k, n, p)
    if pp != p:
        pat = jnp.pad(pat, ((0, 0), (0, 0), (0, pp - p)))
    pat = pat.reshape(k, n * pp)

    block_b = _pick_batch_block(n, pp)
    y = _conv_tanh(pat, w_mat, b_col, pp, block_b)         # (Cout, N*Pp)

    y = y.reshape(cout, n, pp)[:, :, :p].reshape(cout, n, ho, wo)
    # 2x2/stride-2 average pool AFTER tanh, as XLA reshape+mean on the tiny
    # output (replaces the former dense (P, P/4) 99.5%-zero pool matmul).
    y = y.reshape(cout, n, ho // 2, 2, wo // 2, 2).mean(axis=(3, 5))
    return y                                               # (Cout, N, Ho/2, Wo/2)


def _classifier_fused(f, p):
    """Single pallas_call for Linear->Tanh->Linear->Tanh->Linear.

    Batch of 2 easily fits one block; for very large batches a row-tiled grid
    over the batch would be added here (the weight matrices total < 250 KB).
    """
    n = f.shape[0]
    num_classes = p["fw3t"].shape[1]
    return pl.pallas_call(
        _classifier_kernel,
        out_shape=jax.ShapeDtypeStruct((n, num_classes), jnp.float32),
        in_specs=[_VMEM_SPEC] * 7,
        out_specs=_VMEM_SPEC,
    )(f, p["fw1t"], p["fb1r"], p["fw2t"], p["fb2r"], p["fw3t"], p["fb3r"])


# -------------------------------- LeNet model ---------------------------------

def init_lenet_params(key, num_classes=10):
    """torch-layout LeNet parameters (Conv OIHW, Linear (out, in))."""
    def uni(k, shape, fan_in):
        bound = 1.0 / np.sqrt(fan_in)
        return jax.random.uniform(k, shape, jnp.float32, -bound, bound)

    ks = jax.random.split(key, 10)
    return dict(
        w1=uni(ks[0], (6, 3, 5, 5), 3 * 25),   b1=uni(ks[1], (6,), 3 * 25),
        w2=uni(ks[2], (16, 6, 5, 5), 6 * 25),  b2=uni(ks[3], (16,), 6 * 25),
        fw1=uni(ks[4], (120, 400), 400),       fb1=uni(ks[5], (120,), 400),
        fw2=uni(ks[6], (84, 120), 120),        fb2=uni(ks[7], (84,), 120),
        fw3=uni(ks[8], (num_classes, 84), 84), fb3=uni(ks[9], (num_classes,), 84),
    )


def prepare_params(p):
    """One-time kernel-layout prep (called ONCE outside the jitted forward):
    flatten conv weights to (Cout, K), biases to (Cout, 1), pre-transpose FC."""
    return dict(
        w1m=p["w1"].reshape(p["w1"].shape[0], -1), b1c=p["b1"].reshape(-1, 1),
        w2m=p["w2"].reshape(p["w2"].shape[0], -1), b2c=p["b2"].reshape(-1, 1),
        fw1t=p["fw1"].T, fb1r=p["fb1"].reshape(1, -1),
        fw2t=p["fw2"].T, fb2r=p["fb2"].reshape(1, -1),
        fw3t=p["fw3"].T, fb3r=p["fb3"].reshape(1, -1),
    )


def lenet_forward(x, p):
    """LeNet forward; x is NCHW (N, 3, 28, 28), p = prepare_params(...)."""
    n = x.shape[0]
    # TODO(synk): full single-kernel fusion (conv1 -> conv2 -> classifier with
    # all intermediates in VMEM) needs in-kernel im2col, i.e. spatial-collapse
    # reshapes Mosaic does not lower reliably; kept per-stage fusion + XLA glue.
    y = _conv_tanh_pool_stage(x, "NCHW", p["w1m"], p["b1c"], 5, 5, padding=2)
    # y: (6, N, 14, 14) channel-major -> feed straight into stage 2 as "CNHW".
    y = _conv_tanh_pool_stage(y, "CNHW", p["w2m"], p["b2c"], 5, 5, padding=0)
    # y: (16, N, 5, 5) -> torch Flatten order (C, H, W) per image -> (N, 400).
    f = jnp.transpose(y, (1, 0, 2, 3)).reshape(n, -1)
    return _classifier_fused(f, p)


def lenet_reference(x, p):
    """Pure-JAX reference (full f32 precision) for numerical sanity check."""
    hp = jax.lax.Precision.HIGHEST

    def conv(x, w, b, pad):
        y = lax.conv_general_dilated(
            x, w, window_strides=(1, 1), padding=[(pad, pad), (pad, pad)],
            dimension_numbers=("NCHW", "OIHW", "NCHW"), precision=hp)
        return y + b[None, :, None, None]

    def pool(x):
        n, c, h, w = x.shape
        return x.reshape(n, c, h // 2, 2, w // 2, 2).mean(axis=(3, 5))

    y = pool(jnp.tanh(conv(x, p["w1"], p["b1"], 2)))
    y = pool(jnp.tanh(conv(y, p["w2"], p["b2"], 0)))
    f = y.reshape(x.shape[0], -1)
    h = jnp.tanh(jnp.dot(f, p["fw1"].T, precision=hp) + p["fb1"])
    h = jnp.tanh(jnp.dot(h, p["fw2"].T, precision=hp) + p["fb2"])
    return jnp.dot(h, p["fw3"].T, precision=hp) + p["fb3"]


if __name__ == "__main__":
    key = jax.random.PRNGKey(0)
    kx, kp = jax.random.split(key)
    # Classifier expects 16*5*5 = 400 features -> 3-channel 28x28 input, batch=2.
    x = jax.random.normal(kx, (2, 3, 28, 28), jnp.float32)
    params = init_lenet_params(kp)
    kparams = prepare_params(params)     # one-time layout prep, not per forward

    out = jax.jit(lenet_forward)(x, kparams)
    out = jax.block_until_ready(out)
    assert out.shape == (2, 10), out.shape

    ref = lenet_reference(x, params)
    max_err = float(jnp.max(jnp.abs(out - ref)))
    # f32 everywhere; 5e-3 leaves margin only for MXU f32 multi-pass rounding.
    # TODO(synk): a bf16 patch/weight variant (single-pass MXU on v6e/v7x) would
    # need this relaxed to ~2e-2.
    assert np.isfinite(max_err) and max_err < 5e-3, f"max_err={max_err}"
    print("KERNEL_OK")
</pallas_src>

<mosaic_0001>
module attributes {stable_mosaic.version = 11 : i64} {
  func.func @_conv_tanh_kernel(%arg0: i32, %arg1: memref<75x896xf32, #tpu.memory_space<vmem>>, %arg2: memref<6x75xf32, #tpu.memory_space<vmem>>, %arg3: memref<6x1xf32, #tpu.memory_space<vmem>>, %arg4: memref<6x896xf32, #tpu.memory_space<vmem>>) attributes {dimension_semantics = [#tpu.dimension_semantics<parallel>], iteration_bounds = array<i64: 2>, scalar_prefetch = 0 : i64, scratch_operands = 0 : i64, tpu.core_type = #tpu.core_type<tc>, window_params = [{transform_indices = @transform_0, window_bounds = array<i64: 75, 896>}, {pipeline_mode = #tpu.pipeline_mode<synchronous>, transform_indices = @transform_1, window_bounds = array<i64: 6, 75>}, {pipeline_mode = #tpu.pipeline_mode<synchronous>, transform_indices = @transform_2, window_bounds = array<i64: 6, 1>}, {transform_indices = @transform_3, window_bounds = array<i64: 6, 896>}]} {
    %c0 = arith.constant 0 : index
    %c0_0 = arith.constant 0 : index
    %0 = vector.load %arg2[%c0, %c0_0] : memref<6x75xf32, #tpu.memory_space<vmem>>, vector<6x75xf32>
    %c0_1 = arith.constant 0 : index
    %c0_2 = arith.constant 0 : index
    %1 = vector.load %arg1[%c0_1, %c0_2] : memref<75x896xf32, #tpu.memory_space<vmem>>, vector<75x896xf32>
    %cst = arith.constant dense<0.000000e+00> : vector<6x896xf32>
    %2 = tpu.matmul %0, %1, %cst {dimension_numbers = #tpu.dot_dimension_numbers<[1], [0], [0], [1], [0, 0, 1, 1], [], []>} : vector<6x75xf32>, vector<75x896xf32>, vector<6x896xf32> -> vector<6x896xf32>
    %c0_3 = arith.constant 0 : index
    %c0_4 = arith.constant 0 : index
    %3 = vector.load %arg3[%c0_3, %c0_4] : memref<6x1xf32, #tpu.memory_space<vmem>>, vector<6x1xf32>
    %4 = vector.broadcast %3 : vector<6x1xf32> to vector<6x896xf32>
    %5 = arith.addf %2, %4 : vector<6x896xf32>
    %6 = math.tanh %5 : vector<6x896xf32>
    %c0_5 = arith.constant 0 : index
    %c0_6 = arith.constant 0 : index
    %7 = vector.load %arg4[%c0_5, %c0_6] : memref<6x896xf32, #tpu.memory_space<vmem>>, vector<6x896xf32>
    tpu.vector_store %arg4[%c0_5, %c0_6], %6 {strides = array<i32>} : memref<6x896xf32, #tpu.memory_space<vmem>>, vector<6x896xf32>,
    return
  }
  func.func @transform_0(%arg0: i32) -> (i32, i32) {
    %c0_i32 = arith.constant 0 : i32
    %c0_i32_0 = arith.constant 0 : i32
    return %c0_i32, %arg0 : i32, i32
  }
  func.func @transform_1(%arg0: i32) -> (i32, i32) {
    %c0_i32 = arith.constant 0 : i32
    %c0_i32_0 = arith.constant 0 : i32
    %c0_i32_1 = arith.constant 0 : i32
    return %c0_i32, %c0_i32_0 : i32, i32
  }
  func.func @transform_2(%arg0: i32) -> (i32, i32) {
    %c0_i32 = arith.constant 0 : i32
    %c0_i32_0 = arith.constant 0 : i32
    %c0_i32_1 = arith.constant 0 : i32
    return %c0_i32, %c0_i32_0 : i32, i32
  }
  func.func @transform_3(%arg0: i32) -> (i32, i32) {
    %c0_i32 = arith.constant 0 : i32
    %c0_i32_0 = arith.constant 0 : i32
    return %c0_i32, %arg0 : i32, i32
  }
}

module attributes {stable_mosaic.version = 11 : i64} {
  func.func @_conv_tanh_kernel(%arg0: i32, %arg1: memref<150x128xf32, #tpu.memory_space<vmem>>, %arg2: memref<16x150xf32, #tpu.memory_space<vmem>>, %arg3: memref<16x1xf32, #tpu.memory_space<vmem>>, %arg4: memref<16x128xf32, #tpu.memory_space<vmem>>) attributes {dimension_semantics = [#tpu.dimension_semantics<parallel>], iteration_bounds = array<i64: 2>, scalar_prefetch = 0 : i64, scratch_operands = 0 : i64, tpu.core_type = #tpu.core_type<tc>, window_params = [{transform_indices = @transform_0, window_bounds = array<i64: 150, 128>}, {pipeline_mode = #tpu.pipeline_mode<synchronous>, transform_indices = @transform_1, window_bounds = array<i64: 16, 150>}, {pipeline_mode = #tpu.pipeline_mode<synchronous>, transform_indices = @transform_2, window_bounds = array<i64: 16, 1>}, {transform_indices = @transform_3, window_bounds = array<i64: 16, 128>}]} {
    %c0 = arith.constant 0 : index
    %c0_0 = arith.constant 0 : index
    %0 = vector.load %arg2[%c0, %c0_0] : memref<16x150xf32, #tpu.memory_space<vmem>>, vector<16x150xf32>
    %c0_1 = arith.constant 0 : index
    %c0_2 = arith.constant 0 : index
    %1 = vector.load %arg1[%c0_1, %c0_2] : memref<150x128xf32, #tpu.memory_space<vmem>>, vector<150x128xf32>
    %cst = arith.constant dense<0.000000e+00> : vector<16x128xf32>
    %2 = tpu.matmul %0, %1, %cst {dimension_numbers = #tpu.dot_dimension_numbers<[1], [0], [0], [1], [0, 0, 1, 1], [], []>} : vector<16x150xf32>, vector<150x128xf32>, vector<16x128xf32> -> vector<16x128xf32>
    %c0_3 = arith.constant 0 : index
    %c0_4 = arith.constant 0 : index
    %3 = vector.load %arg3[%c0_3, %c0_4] : memref<16x1xf32, #tpu.memory_space<vmem>>, vector<16x1xf32>
    %4 = vector.broadcast %3 : vector<16x1xf32> to vector<16x128xf32>
    %5 = arith.addf %2, %4 : vector<16x128xf32>
    %6 = math.tanh %5 : vector<16x128xf32>
    %c0_5 = arith.constant 0 : index
    %c0_6 = arith.constant 0 : index
    %7 = vector.load %arg4[%c0_5, %c0_6] : memref<16x128xf32, #tpu.memory_space<vmem>>, vector<16x128xf32>
    tpu.vector_store %arg4[%c0_5, %c0_6], %6 {strides = array<i32>} : memref<16x128xf32, #tpu.memory_space<vmem>>, vector<16x128xf32>,
    return
  }
  func.func @transform_0(%arg0: i32) -> (i32, i32) {
    %c0_i32 = arith.constant 0 : i32
    %c0_i32_0 = arith.constant 0 : i32
    return %c0_i32, %arg0 : i32, i32
  }
  func.func @transform_1(%arg0: i32) -> (i32, i32) {
    %c0_i32 = arith.constant 0 : i32
    %c0_i32_0 = arith.constant 0 : i32
    %c0_i32_1 = arith.constant 0 : i32
    return %c0_i32, %c0_i32_0 : i32, i32
  }
  func.func @transform_2(%arg0: i32) -> (i32, i32) {
    %c0_i32 = arith.constant 0 : i32
    %c0_i32_0 = arith.constant 0 : i32
    %c0_i32_1 = arith.constant 0 : i32
    return %c0_i32, %c0_i32_0 : i32, i32
  }
  func.func @transform_3(%arg0: i32) -> (i32, i32) {
    %c0_i32 = arith.constant 0 : i32
    %c0_i32_0 = arith.constant 0 : i32
    return %c0_i32, %arg0 : i32, i32
  }
}

module attributes {stable_mosaic.version = 11 : i64} {
  func.func @_classifier_kernel(%arg0: memref<2x400xf32, #tpu.memory_space<vmem>>, %arg1: memref<400x120xf32, #tpu.memory_space<vmem>>, %arg2: memref<1x120xf32, #tpu.memory_space<vmem>>, %arg3: memref<120x84xf32, #tpu.memory_space<vmem>>, %arg4: memref<1x84xf32, #tpu.memory_space<vmem>>, %arg5: memref<84x10xf32, #tpu.memory_space<vmem>>, %arg6: memref<1x10xf32, #tpu.memory_space<vmem>>, %arg7: memref<2x10xf32, #tpu.memory_space<vmem>>) attributes {dimension_semantics = [], scalar_prefetch = 0 : i64, scratch_operands = 0 : i64, tpu.core_type = #tpu.core_type<tc>} {
    %c0 = arith.constant 0 : index
    %c0_0 = arith.constant 0 : index
    %0 = vector.load %arg0[%c0, %c0_0] : memref<2x400xf32, #tpu.memory_space<vmem>>, vector<2x400xf32>
    %c0_1 = arith.constant 0 : index
    %c0_2 = arith.constant 0 : index
    %1 = vector.load %arg1[%c0_1, %c0_2] : memref<400x120xf32, #tpu.memory_space<vmem>>, vector<400x120xf32>
    %cst = arith.constant dense<0.000000e+00> : vector<2x120xf32>
    %2 = tpu.matmul %0, %1, %cst {dimension_numbers = #tpu.dot_dimension_numbers<[1], [0], [0], [1], [0, 0, 1, 1], [], []>} : vector<2x400xf32>, vector<400x120xf32>, vector<2x120xf32> -> vector<2x120xf32>
    %c0_3 = arith.constant 0 : index
    %c0_4 = arith.constant 0 : index
    %3 = vector.load %arg2[%c0_3, %c0_4] : memref<1x120xf32, #tpu.memory_space<vmem>>, vector<1x120xf32>
    %4 = vector.broadcast %3 : vector<1x120xf32> to vector<2x120xf32>
    %5 = arith.addf %2, %4 : vector<2x120xf32>
    %6 = math.tanh %5 : vector<2x120xf32>
    %c0_5 = arith.constant 0 : index
    %c0_6 = arith.constant 0 : index
    %7 = vector.load %arg3[%c0_5, %c0_6] : memref<120x84xf32, #tpu.memory_space<vmem>>, vector<120x84xf32>
    %cst_7 = arith.constant dense<0.000000e+00> : vector<2x84xf32>
    %8 = tpu.matmul %6, %7, %cst_7 {dimension_numbers = #tpu.dot_dimension_numbers<[1], [0], [0], [1], [0, 0, 1, 1], [], []>} : vector<2x120xf32>, vector<120x84xf32>, vector<2x84xf32> -> vector<2x84xf32>
    %c0_8 = arith.constant 0 : index
    %c0_9 = arith.constant 0 : index
    %9 = vector.load %arg4[%c0_8, %c0_9] : memref<1x84xf32, #tpu.memory_space<vmem>>, vector<1x84xf32>
    %10 = vector.broadcast %9 : vector<1x84xf32> to vector<2x84xf32>
    %11 = arith.addf %8, %10 : vector<2x84xf32>
    %12 = math.tanh %11 : vector<2x84xf32>
    %c0_10 = arith.constant 0 : index
    %c0_11 = arith.constant 0 : index
    %13 = vector.load %arg5[%c0_10, %c0_11] : memref<84x10xf32, #tpu.memory_space<vmem>>, vector<84x10xf32>
    %cst_12 = arith.constant dense<0.000000e+00> : vector<2x10xf32>
    %14 = tpu.matmul %12, %13, %cst_12 {dimension_numbers = #tpu.dot_dimension_numbers<[1], [0], [0], [1], [0, 0, 1, 1], [], []>} : vector<2x84xf32>, vector<84x10xf32>, vector<2x10xf32> -> vector<2x10xf32>
    %c0_13 = arith.constant 0 : index
    %c0_14 = arith.constant 0 : index
    %15 = vector.load %arg6[%c0_13, %c0_14] : memref<1x10xf32, #tpu.memory_space<vmem>>, vector<1x10xf32>
    %16 = vector.broadcast %15 : vector<1x10xf32> to vector<2x10xf32>
    %17 = arith.addf %14, %16 : vector<2x10xf32>
    %c0_15 = arith.constant 0 : index
    %c0_16 = arith.constant 0 : index
    %18 = vector.load %arg7[%c0_15, %c0_16] : memref<2x10xf32, #tpu.memory_space<vmem>>, vector<2x10xf32>
    tpu.vector_store %arg7[%c0_15, %c0_16], %17 {strides = array<i32>} : memref<2x10xf32, #tpu.memory_space<vmem>>, vector<2x10xf32>,
    return
  }
}

</mosaic_0001>

<llo_original>
// kernel: lenet_forward.3
$region0: #{lenet_forward.3}
  #allocation0 [shape = 'u32[]', space=smem, size = 0x4, offset = 0x4, fixed_abs, tag = 'smem constant byte address 0x4 - core index']
  #allocation1 [shape = 'u32[72,128]{1,0:T(1,128)}', space=vmem, size = 0x9000, scoped, tag = 'internal scratch']
  %s0 = inlined_call_operand.vmem [shape: f32[75,1792], index: 0, kind: input, shape index: {}]
  %s1 = inlined_call_operand.vmem [shape: f32[6,75], index: 1, kind: input, shape index: {}]
  %s2 = inlined_call_operand.vmem [shape: f32[6,1], index: 2, kind: input, shape index: {}]
  %s3 = inlined_call_operand.vmem [shape: f32[6,1792], index: 3, kind: output, shape index: {}]
  %s4 = sld [smem:[#allocation0]]
  $region68: #{lenet_forward.3} parent=0
    _
  %s6 = ssub.s32 1, %s4
  %s7 = scalar_select 0, %s6, %s4
  $region1: #{lenet_forward.3} parent=0
    #allocation2 [shape = 'u8[573440]{0}', space=vmem, size = 0x8c000, scoped, tag = 'input window, operand 0']
    loop: start=0, step=1, limit=4
    $region2: #{lenet_forward.3} parent=1 // loop_pre_header
      _
    $region3: #{lenet_forward.3} parent=1 // loop_header
      %s9 = sphi 0, %s13
      %p10 = scmp.ge.s32.totalorder %s9, 4
      %s19 = sphi 0, %s21
      %s22 = sphi 0, %s19
      %s23 = sphi 0, %s22
      %s39 = sphi 0, %s23
      %s43 = sphi 0, %s43
      %s45 = sphi 0, %s43
      %s46 = sphi 0, %s45
      %s60 = sphi 0, %s46
      %s64 = sphi 0, %s64
      %s66 = sphi 0, %s64
      %s67 = sphi 0, %s66
      %s81 = sphi 0, %s67
      %s87 = sphi 0, %s89
      %s90 = sphi 0, %s87
      %s91 = sphi 0, %s90
      %s107 = sphi 0, %s91
    $region4: #{lenet_forward.3} parent=1 // loop_header_branch
      %12 = sbr.rel (%p10) target = $region8
    $region5: #{lenet_forward.3} parent=1 // loop_body
      %s14 = ssub.s32 %s9, 1
      %s15 = ssub.s32 %s9, 2
      %s16 = sadd.s32 %s9, 1
      %s17 = ssub.s32 %s9, %s16
      %p18 = scmp.eq.s32.totalorder %s17, 0
      %s20 = sadd.s32 %s19, 1
      %s21 = scalar_select %p18, %s19, %s20
      %p24 = pneg %p18
      %p25 = scmp.eq.s32.totalorder %s9, 1
      %p26 = por %p24, %p25
      %p27 = scmp.ne.s32.totalorder %s19, %s22
      %p28 = scmp.eq.s32.totalorder %s9, 0
      %p29 = por %p27, %p28
      %p30 = scmp.ne.s32.totalorder %s19, %s22
      %p31 = scmp.eq.s32.totalorder %s14, 1
      %p32 = por %p30, %p31
      %p33 = scmp.ne.s32.totalorder %s22, %s23
      %p34 = scmp.eq.s32.totalorder %s14, 0
      %p35 = por %p33, %p34
      %p36 = scmp.ne.s32.totalorder %s22, %s23
      %p37 = scmp.eq.s32.totalorder %s15, 1
      %p38 = por %p36, %p37
      %p40 = scmp.ne.s32.totalorder %s23, %s39
      %p41 = scmp.eq.s32.totalorder %s15, 0
      %p42 = por %p40, %p41
      %s44 = sadd.s32 %s43, 1
      %p47 = scmp.eq.s32.totalorder %s9, 1
      %p48 = scmp.ne.s32.totalorder %s43, %s45
      %p49 = scmp.eq.s32.totalorder %s9, 0
      %p50 = por %p48, %p49
      %p51 = scmp.ne.s32.totalorder %s43, %s45
      %p52 = scmp.eq.s32.totalorder %s14, 1
      %p53 = por %p51, %p52
      %p54 = scmp.ne.s32.totalorder %s45, %s46
      %p55 = scmp.eq.s32.totalorder %s14, 0
      %p56 = por %p54, %p55
      %p57 = scmp.ne.s32.totalorder %s45, %s46
      %p58 = scmp.eq.s32.totalorder %s15, 1
      %p59 = por %p57, %p58
      %p61 = scmp.ne.s32.totalorder %s46, %s60
      %p62 = scmp.eq.s32.totalorder %s15, 0
      %p63 = por %p61, %p62
      %s65 = sadd.s32 %s64, 1
      %p68 = scmp.eq.s32.totalorder %s9, 1
      %p69 = scmp.ne.s32.totalorder %s64, %s66
      %p70 = scmp.eq.s32.totalorder %s9, 0
      %p71 = por %p69, %p70
      %p72 = scmp.ne.s32.totalorder %s64, %s66
      %p73 = scmp.eq.s32.totalorder %s14, 1
      %p74 = por %p72, %p73
      %p75 = scmp.ne.s32.totalorder %s66, %s67
      %p76 = scmp.eq.s32.totalorder %s14, 0
      %p77 = por %p75, %p76
      %p78 = scmp.ne.s32.totalorder %s66, %s67
      %p79 = scmp.eq.s32.totalorder %s15, 1
      %p80 = por %p78, %p79
      %p82 = scmp.ne.s32.totalorder %s67, %s81
      %p83 = scmp.eq.s32.totalorder %s15, 0
      %p84 = por %p82, %p83
      %s85 = ssub.s32 %s9, %s16
      %p86 = scmp.eq.s32.totalorder %s85, 0
      %s88 = sadd.s32 %s87, 1
      %s89 = scalar_select %p86, %s87, %s88
      %p92 = pneg %p86
      %p93 = scmp.eq.s32.totalorder %s9, 1
      %p94 = por %p92, %p93
      %p95 = scmp.ne.s32.totalorder %s87, %s90
      %p96 = scmp.eq.s32.totalorder %s9, 0
      %p97 = por %p95, %p96
      %p98 = scmp.ne.s32.totalorder %s87, %s90
      %p99 = scmp.eq.s32.totalorder %s14, 1
      %p100 = por %p98, %p99
      %p101 = scmp.ne.s32.totalorder %s90, %s91
      %p102 = scmp.eq.s32.totalorder %s14, 0
      %p103 = por %p101, %p102
      %p104 = scmp.ne.s32.totalorder %s90, %s91
      %p105 = scmp.eq.s32.totalorder %s15, 1
      %p106 = por %p104, %p105
      %p108 = scmp.ne.s32.totalorder %s91, %s107
      %p109 = scmp.eq.s32.totalorder %s15, 0
      %p110 = por %p108, %p109
      %p111 = scmp.le.s32.totalorder 1, %s9
      %p112 = scmp.lt.s32.totalorder %s9, 3
      %p113 = pnand %p111, %p112
      %p114 = pneg %p113
      // Predicated region
      $region9: #{lenet_forward.3} parent=5 // pred_check
        _
      $region10: #{lenet_forward.3} parent=5 // pred_check_branch
        %116 = sbr.rel (%p113) target = $region12
      $region11: #{lenet_forward.3} parent=5 // pred_region
        %s117 = ssub.s32 %s9, 1
        // Predicated region
        $region13: #{lenet_forward.3} parent=11 // pred_check
          %p118 = pneg %p56
        $region14: #{lenet_forward.3} parent=11 // pred_check_branch
          %120 = sbr.rel (%p118) target = $region16
        $region15: #{lenet_forward.3} parent=11 // pred_region
          _
        $region16: #{lenet_forward.3} parent=11 // pred_fallthru
          _
        // Predicated region
        $region17: #{lenet_forward.3} parent=11 // pred_check
          %p121 = pneg %p77
        $region18: #{lenet_forward.3} parent=11 // pred_check_branch
          %123 = sbr.rel (%p121) target = $region20
        $region19: #{lenet_forward.3} parent=11 // pred_region
          _
        $region20: #{lenet_forward.3} parent=11 // pred_fallthru
          _
      $region12: #{lenet_forward.3} parent=5 // pred_fallthru
        _
      %p124 = scmp.lt.s32.totalorder %s9, 2
      // Predicated region
      $region21: #{lenet_forward.3} parent=5 // pred_check
        %p125 = pneg %p124
      $region22: #{lenet_forward.3} parent=5 // pred_check_branch
        %127 = sbr.rel (%p125) target = $region24
      $region23: #{lenet_forward.3} parent=5 // pred_region
        // Predicated region
        $region25: #{lenet_forward.3} parent=23 // pred_check
          %p128 = pneg %p29
        $region26: #{lenet_forward.3} parent=23 // pred_check_branch
          %130 = sbr.rel (%p128) target = $region28
        $region27: #{lenet_forward.3} parent=23 // pred_region
          %s131 = sand.u32 %s19, 1
          %s132 = sand.u32 %s19, 1
          %s133 = smul.addr %s132, 560
          %s134 = scalar_lea.vmem [#allocation2], %s133
          %s135 = smul.u32 7, %s9
          %s136 = smul.addr %s135, 8
          %s137 = scalar_lea.vmem %s0, %s136
          // Predicated region
          $region29: #{lenet_forward.3} parent=27 // pred_check
            _
          $region30: #{lenet_forward.3} parent=27 // pred_check_branch
            %139 = sbr.rel (0) target = $region32
          $region31: #{lenet_forward.3} parent=27 // pred_region
            // Predicated region
            $region33: #{lenet_forward.3} parent=31 // pred_check
              _
            $region34: #{lenet_forward.3} parent=31 // pred_check_branch
              %141 = sbr.rel (0) target = $region36
            $region35: #{lenet_forward.3} parent=31 // pred_region
              loop: start=0, step=1, limit=1
              $region37: #{lenet_forward.3} parent=35 // loop_pre_header
                _
              $region38: #{lenet_forward.3} parent=35 // loop_header
                %s143 = sphi 0, %s147
                %p144 = scmp.ge.s32.totalorder %s143, 1
                %s148 = sphi %s137, %s137
                %s149 = sphi %s134, %s134
              $region39: #{lenet_forward.3} parent=35 // loop_header_branch
                %146 = sbr.rel (%p144) target = $region43
              $region40: #{lenet_forward.3} parent=35 // loop_body
                %v150 = vld [vmem:[%s148] sm:$0xff]
                %151 = vst [vmem:[%s149] sm:$0xff] %v150
                %v152 = vld [vmem:[%s148 + $0x8] sm:$0xff]
                %153 = vst [vmem:[%s149 + $0x8] sm:$0xff] %v152
                %v154 = vld [vmem:[%s148 + $0x10] sm:$0xff]
                %155 = vst [vmem:[%s149 + $0x10] sm:$0xff] %v154
                %v156 = vld [vmem:[%s148 + $0x18] sm:$0xff]
                %157 = vst [vmem:[%s149 + $0x18] sm:$0xff] %v156
                %v158 = vld [vmem:[%s148 + $0x20] sm:$0xff]
                %159 = vst [vmem:[%s149 + $0x20] sm:$0xff] %v158
                %v160 = vld [vmem:[%s148 + $0x28] sm:$0xff]
                %161 = vst [vmem:[%s149 + $0x28] sm:$0xff] %v160
                %v162 = vld [vmem:[%s148 + $0x30] sm:$0xff]
                %163 = vst [vmem:[%s149 + $0x30] sm:$0xff] %v162
                %v164 = vld [vmem:[%s148 + $0x70] sm:$0xff]
                %165 = vst [vmem:[%s149 + $0x38] sm:$0xff] %v164
                %v166 = vld [vmem:[%s148 + $0x78] sm:$0xff]
                %167 = vst [vmem:[%s149 + $0x40] sm:$0xff] %v166
                %v168 = vld [vmem:[%s148 + $0x80] sm:$0xff]
                %169 = vst [vmem:[%s149 + $0x48] sm:$0xff] %v168
                %v170 = vld [vmem:[%s148 + $0x88] sm:$0xff]
                %171 = vst [vmem:[%s149 + $0x50] sm:$0xff] %v170
                %v172 = vld [vmem:[%s148 + $0x90] sm:$0xff]
                %173 = vst [vmem:[%s149 + $0x58] sm:$0xff] %v172
                %v174 = vld [vmem:[%s148 + $0x98] sm:$0xff]
                %175 = vst [vmem:[%s149 + $0x60] sm:$0xff] %v174
                %v176 = vld [vmem:[%s148 + $0xa0] sm:$0xff]
                %177 = vst [vmem:[%s149 + $0x68] sm:$0xff] %v176
                %v178 = vld [vmem:[%s148 + $0xe0] sm:$0xff]
                %179 = vst [vmem:[%s149 + $0x70] sm:$0xff] %v178
                %v180 = vld [vmem:[%s148 + $0xe8] sm:$0xff]
                %181 = vst [vmem:[%s149 + $0x78] sm:$0xff] %v180
                %v182 = vld [vmem:[%s148 + $0xf0] sm:$0xff]
                %183 = vst [vmem:[%s149 + $0x80] sm:$0xff] %v182
                %v184 = vld [vmem:[%s148 + $0xf8] sm:$0xff]
                %185 = vst [vmem:[%s149 + $0x88] sm:$0xff] %v184
                %v186 = vld [vmem:[%s148 + $0x100] sm:$0xff]
                %187 = vst [vmem:[%s149 + $0x90] sm:$0xff] %v186
                %v188 = vld [vmem:[%s148 + $0x108] sm:$0xff]
                %189 = vst [vmem:[%s149 + $0x98] sm:$0xff] %v188
                %v190 = vld [vmem:[%s148 + $0x110] sm:$0xff]
                %191 = vst [vmem:[%s149 + $0xa0] sm:$0xff] %v190
                %v192 = vld [vmem:[%s148 + $0x150] sm:$0xff]
                %193 = vst [vmem:[%s149 + $0xa8] sm:$0xff] %v192
                %v194 = vld [vmem:[%s148 + $0x158] sm:$0xff]
                %195 = vst [vmem:[%s149 + $0xb0] sm:$0xff] %v194
                %v196 = vld [vmem:[%s148 + $0x160] sm:$0xff]
                %197 = vst [vmem:[%s149 + $0xb8] sm:$0xff] %v196
                %v198 = vld [vmem:[%s148 + $0x168] sm:$0xff]
                %199 = vst [vmem:[%s149 + $0xc0] sm:$0xff] %v198
                %v200 = vld [vmem:[%s148 + $0x170] sm:$0xff]
                %201 = vst [vmem:[%s149 + $0xc8] sm:$0xff] %v200
                %v202 = vld [vmem:[%s148 + $0x178] sm:$0xff]
                %203 = vst [vmem:[%s149 + $0xd0] sm:$0xff] %v202
                %v204 = vld [vmem:[%s148 + $0x180] sm:$0xff]
                %205 = vst [vmem:[%s149 + $0xd8] sm:$0xff] %v204
                %v206 = vld [vmem:[%s148 + $0x1c0] sm:$0xff]
                %207 = vst [vmem:[%s149 + $0xe0] sm:$0xff] %v206
                %v208 = vld [vmem:[%s148 + $0x1c8] sm:$0xff]
                %209 = vst [vmem:[%s149 + $0xe8] sm:$0xff] %v208
                %v210 = vld [vmem:[%s148 + $0x1d0] sm:$0xff]
                %211 = vst [vmem:[%s149 + $0xf0] sm:$0xff] %v210
                %v212 = vld [vmem:[%s148 + $0x1d8] sm:$0xff]
                %213 = vst [vmem:[%s149 + $0xf8] sm:$0xff] %v212
                %v214 = vld [vmem:[%s148 + $0x1e0] sm:$0xff]
                %215 = vst [vmem:[%s149 + $0x100] sm:$0xff] %v214
                %v216 = vld [vmem:[%s148 + $0x1e8] sm:$0xff]
                %217 = vst [vmem:[%s149 + $0x108] sm:$0xff] %v216
                %v218 = vld [vmem:[%s148 + $0x1f0] sm:$0xff]
                %219 = vst [vmem:[%s149 + $0x110] sm:$0xff] %v218
                %v220 = vld [vmem:[%s148 + $0x230] sm:$0xff]
                %221 = vst [vmem:[%s149 + $0x118] sm:$0xff] %v220
                %v222 = vld [vmem:[%s148 + $0x238] sm:$0xff]
                %223 = vst [vmem:[%s149 + $0x120] sm:$0xff] %v222
                %v224 = vld [vmem:[%s148 + $0x240] sm:$0xff]
                %225 = vst [vmem:[%s149 + $0x128] sm:$0xff] %v224
                %v226 = vld [vmem:[%s148 + $0x248] sm:$0xff]
                %227 = vst [vmem:[%s149 + $0x130] sm:$0xff] %v226
                %v228 = vld [vmem:[%s148 + $0x250] sm:$0xff]
                %229 = vst [vmem:[%s149 + $0x138] sm:$0xff] %v228
                %v230 = vld [vmem:[%s148 + $0x258] sm:$0xff]
                %231 = vst [vmem:[%s149 + $0x140] sm:$0xff] %v230
                %v232 = vld [vmem:[%s148 + $0x260] sm:$0xff]
                %233 = vst [vmem:[%s149 + $0x148] sm:$0xff] %v232
                %v234 = vld [vmem:[%s148 + $0x2a0] sm:$0xff]
                %235 = vst [vmem:[%s149 + $0x150] sm:$0xff] %v234
                %v236 = vld [vmem:[%s148 + $0x2a8] sm:$0xff]
                %237 = vst [vmem:[%s149 + $0x158] sm:$0xff] %v236
                %v238 = vld [vmem:[%s148 + $0x2b0] sm:$0xff]
                %239 = vst [vmem:[%s149 + $0x160] sm:$0xff] %v238
                %v240 = vld [vmem:[%s148 + $0x2b8] sm:$0xff]
                %241 = vst [vmem:[%s149 + $0x168] sm:$0xff] %v240
                %v242 = vld [vmem:[%s148 + $0x2c0] sm:$0xff]
                %243 = vst [vmem:[%s149 + $0x170] sm:$0xff] %v242
                %v244 = vld [vmem:[%s148 + $0x2c8] sm:$0xff]
                %245 = vst [vmem:[%s149 + $0x178] sm:$0xff] %v244
                %v246 = vld [vmem:[%s148 + $0x2d0] sm:$0xff]
                %247 = vst [vmem:[%s149 + $0x180] sm:$0xff] %v246
                %v248 = vld [vmem:[%s148 + $0x310] sm:$0xff]
                %249 = vst [vmem:[%s149 + $0x188] sm:$0xff] %v248
                %v250 = vld [vmem:[%s148 + $0x318] sm:$0xff]
                %251 = vst [vmem:[%s149 + $0x190] sm:$0xff] %v250
                %v252 = vld [vmem:[%s148 + $0x320] sm:$0xff]
                %253 = vst [vmem:[%s149 + $0x198] sm:$0xff] %v252
                %v254 = vld [vmem:[%s148 + $0x328] sm:$0xff]
                %255 = vst [vmem:[%s149 + $0x1a0] sm:$0xff] %v254
                %v256 = vld [vmem:[%s148 + $0x330] sm:$0xff]
                %257 = vst [vmem:[%s149 + $0x1a8] sm:$0xff] %v256
                %v258 = vld [vmem:[%s148 + $0x338] sm:$0xff]
                %259 = vst [vmem:[%s149 + $0x1b0] sm:$0xff] %v258
                %v260 = vld [vmem:[%s148 + $0x340] sm:$0xff]
                %261 = vst [vmem:[%s149 + $0x1b8] sm:$0xff] %v260
                %v262 = vld [vmem:[%s148 + $0x380] sm:$0xff]
                %263 = vst [vmem:[%s149 + $0x1c0] sm:$0xff] %v262
                %v264 = vld [vmem:[%s148 + $0x388] sm:$0xff]
                %265 = vst [vmem:[%s149 + $0x1c8] sm:$0xff] %v264
                %v266 = vld [vmem:[%s148 + $0x390] sm:$0xff]
                %267 = vst [vmem:[%s149 + $0x1d0] sm:$0xff] %v266
                %v268 = vld [vmem:[%s148 + $0x398] sm:$0xff]
                %269 = vst [vmem:[%s149 + $0x1d8] sm:$0xff] %v268
                %v270 = vld [vmem:[%s148 + $0x3a0] sm:$0xff]
                %271 = vst [vmem:[%s149 + $0x1e0] sm:$0xff] %v270
                %v272 = vld [vmem:[%s148 + $0x3a8] sm:$0xff]
                %273 = vst [vmem:[%s149 + $0x1e8] sm:$0xff] %v272
                %v274 = vld [vmem:[%s148 + $0x3b0] sm:$0xff]
                %275 = vst [vmem:[%s149 + $0x1f0] sm:$0xff] %v274
                %v276 = vld [vmem:[%s148 + $0x3f0] sm:$0xff]
                %277 = vst [vmem:[%s149 + $0x1f8] sm:$0xff] %v276
                %v278 = vld [vmem:[%s148 + $0x3f8] sm:$0xff]
                %279 = vst [vmem:[%s149 + $0x200] sm:$0xff] %v278
                %v280 = vld [vmem:[%s148 + $0x400] sm:$0xff]
                %281 = vst [vmem:[%s149 + $0x208] sm:$0xff] %v280
                %v282 = vld [vmem:[%s148 + $0x408] sm:$0xff]
                %283 = vst [vmem:[%s149 + $0x210] sm:$0xff] %v282
                %v284 = vld [vmem:[%s148 + $0x410] sm:$0xff]
                %285 = vst [vmem:[%s149 + $0x218] sm:$0xff] %v284
                %v286 = vld [vmem:[%s148 + $0x418] sm:$0xff]
                %287 = vst [vmem:[%s149 + $0x220] sm:$0xff] %v286
                %v288 = vld [vmem:[%s148 + $0x420] sm:$0xff]
                %289 = vst [vmem:[%s149 + $0x228] sm:$0xff] %v288
              $region41: #{lenet_forward.3} parent=35 // loop_footer
                %s147 = sadd.s32 1, %s143
              $region42: #{lenet_forward.3} parent=35 // loop_footer_branch
                %142 = sbr.rel target = $region38
              $region43: #{lenet_forward.3} parent=35 // loop_exit
                _
            $region36: #{lenet_forward.3} parent=31 // pred_fallthru
              _
            // Predicated region
            $region44: #{lenet_forward.3} parent=31 // pred_check
              _
            $region45: #{lenet_forward.3} parent=31 // pred_check_branch
              %291 = sbr.rel target = $region47
            $region46: #{lenet_forward.3} parent=31 // pred_region
              _
            $region47: #{lenet_forward.3} parent=31 // pred_fallthru
              _
          $region32: #{lenet_forward.3} parent=27 // pred_fallthru
            _
          %292 = vnop
        $region28: #{lenet_forward.3} parent=23 // pred_fallthru
          _
      $region24: #{lenet_forward.3} parent=5 // pred_fallthru
        _
      %p293 = scmp.le.s32.totalorder 1, %s9
      %p294 = scmp.lt.s32.totalorder %s9, 3
      %p295 = pnand %p293, %p294
      %p296 = pneg %p295
      // Predicated region
      $region48: #{lenet_forward.3} parent=5 // pred_check
        _
      $region49: #{lenet_forward.3} parent=5 // pred_check_branch
        %298 = sbr.rel (%p295) target = $region51
      $region50: #{lenet_forward.3} parent=5 // pred_region
        %s299 = ssub.s32 %s9, 1
        %s300 = sand.u32 %s22, 1
        %s301 = sand.u32 %s22, 1
        %s302 = smul.addr %s301, 560
        %s303 = scalar_lea.vmem [#allocation2], %s302
        // Predicated region
        $region52: #{lenet_forward.3} parent=50 // pred_check
          %p304 = pneg %p35
        $region53: #{lenet_forward.3} parent=50 // pred_check_branch
          %306 = sbr.rel (%p304) target = $region55
        $region54: #{lenet_forward.3} parent=50 // pred_region
          _
        $region55: #{lenet_forward.3} parent=50 // pred_fallthru
          _
        %s307 = sand.u32 %s22, 1
        %s308 = sand.u32 %s22, 1
        %s309 = smul.addr %s308, 560
        %s310 = scalar_lea.vmem [#allocation2], %s309
        %p311 = pneg %p35
        %p312 = pneg %p32
        %p313 = pneg %p56
        %p314 = pneg %p53
        %p315 = pneg %p77
        %p316 = pneg %p74
        %p317 = pneg %p103
        %p318 = pneg %p100
        %s319 = smul.u32 7, %s14
        %p320 = scmp.lt.s32.totalorder %s319, 13
        %s321 = scalar_select %p320, %s319, 13
        %s322 = smul.addr %s321, 8
        %s323 = scalar_lea.vmem %s3, %s322
        %s324 = smul.u32 7, %s14
        %s325 = smul.u32 7, %s14
        %p326 = scmp.lt.s32.totalorder %s325, 13
        %s327 = scalar_select %p326, %s325, 13
        %s328 = smul.addr %s327, 8
        %s329 = scalar_lea.vmem %s3, %s328
        %s330 = smul.u32 7, %s14
        %v331 = vld [vmem:[%s1] sm:$0x3f]
        %v332 = vld [vmem:[%s303] sm:$0xff]
        %v333 = vld [vmem:[%s303 + $0x8] sm:$0xff]
        %v334 = vld [vmem:[%s303 + $0x10] sm:$0xff]
        %v335 = vld [vmem:[%s303 + $0x18] sm:$0xff]
        %v336 = vld [vmem:[%s303 + $0x20] sm:$0xff]
        %v337 = vld [vmem:[%s303 + $0x28] sm:$0xff]
        %v338 = vld [vmem:[%s303 + $0x30] sm:$0xff]
        %v339 = vld [vmem:[%s303 + $0x38] sm:$0xff]
        %v340 = vld [vmem:[%s303 + $0x40] sm:$0xff]
        %v341 = vld [vmem:[%s303 + $0x48] sm:$0xff]
        %v342 = vld [vmem:[%s303 + $0x50] sm:$0xff]
        %v343 = vld [vmem:[%s303 + $0x58] sm:$0xff]
        %v344 = vld [vmem:[%s303 + $0x60] sm:$0xff]
        %v345 = vld [vmem:[%s303 + $0x68] sm:$0xff]
        %v346 = vld [vmem:[%s303 + $0x70] sm:$0xff]
        %v347 = vld [vmem:[%s303 + $0x78] sm:$0xff]
        %v348 = vld [vmem:[%s303 + $0x80] sm:$0xff]
        %v349 = vld [vmem:[%s303 + $0x88] sm:$0xff]
        %v350 = vld [vmem:[%s303 + $0x90] sm:$0xff]
        %v351 = vld [vmem:[%s303 + $0x98] sm:$0xff]
        %v352 = vld [vmem:[%s303 + $0xa0] sm:$0xff]
        %v353 = vld [vmem:[%s303 + $0xa8] sm:$0xff]
        %v354 = vld [vmem:[%s303 + $0xb0] sm:$0xff]
        %v355 = vld [vmem:[%s303 + $0xb8] sm:$0xff]
        %v356 = vld [vmem:[%s303 + $0xc0] sm:$0xff]
        %v357 = vld [vmem:[%s303 + $0xc8] sm:$0xff]
        %v358 = vld [vmem:[%s303 + $0xd0] sm:$0xff]
        %v359 = vld [vmem:[%s303 + $0xd8] sm:$0xff]
        %v360 = vld [vmem:[%s303 + $0xe0] sm:$0xff]
        %v361 = vld [vmem:[%s303 + $0xe8] sm:$0xff]
        %v362 = vld [vmem:[%s303 + $0xf0] sm:$0xff]
        %v363 = vld [vmem:[%s303 + $0xf8] sm:$0xff]
        %v364 = vld [vmem:[%s303 + $0x100] sm:$0xff]
        %v365 = vld [vmem:[%s303 + $0x108] sm:$0xff]
        %v366 = vld [vmem:[%s303 + $0x110] sm:$0xff]
        %v367 = vld [vmem:[%s303 + $0x118] sm:$0xff]
        %v368 = vld [vmem:[%s303 + $0x120] sm:$0xff]
        %v369 = vld [vmem:[%s303 + $0x128] sm:$0xff]
        %v370 = vld [vmem:[%s303 + $0x130] sm:$0xff]
        %v371 = vld [vmem:[%s303 + $0x138] sm:$0xff]
        %v372 = vld [vmem:[%s303 + $0x140] sm:$0xff]
        %v373 = vld [vmem:[%s303 + $0x148] sm:$0xff]
        %v374 = vld [vmem:[%s303 + $0x150] sm:$0xff]
        %v375 = vld [vmem:[%s303 + $0x158] sm:$0xff]
        %v376 = vld [vmem:[%s303 + $0x160] sm:$0xff]
        %v377 = vld [vmem:[%s303 + $0x168] sm:$0xff]
        %v378 = vld [vmem:[%s303 + $0x170] sm:$0xff]
        %v379 = vld [vmem:[%s303 + $0x178] sm:$0xff]
        %v380 = vld [vmem:[%s303 + $0x180] sm:$0xff]
        %v381 = vld [vmem:[%s303 + $0x188] sm:$0xff]
        %v382 = vld [vmem:[%s303 + $0x190] sm:$0xff]
        %v383 = vld [vmem:[%s303 + $0x198] sm:$0xff]
        %v384 = vld [vmem:[%s303 + $0x1a0] sm:$0xff]
        %v385 = vld [vmem:[%s303 + $0x1a8] sm:$0xff]
        %v386 = vld [vmem:[%s303 + $0x1b0] sm:$0xff]
        %v387 = vld [vmem:[%s303 + $0x1b8] sm:$0xff]
        %v388 = vld [vmem:[%s303 + $0x1c0] sm:$0xff]
        %v389 = vld [vmem:[%s303 + $0x1c8] sm:$0xff]
        %v390 = vld [vmem:[%s303 + $0x1d0] sm:$0xff]
        %v391 = vld [vmem:[%s303 + $0x1d8] sm:$0xff]
        %v392 = vld [vmem:[%s303 + $0x1e0] sm:$0xff]
        %v393 = vld [vmem:[%s303 + $0x1e8] sm:$0xff]
        %v394 = vld [vmem:[%s303 + $0x1f0] sm:$0xff]
        %v395 = vld [vmem:[%s303 + $0x1f8] sm:$0x7]
        %v396 = vld [vmem:[%s303 + $0x200] sm:$0x7]
        %v397 = vld [vmem:[%s303 + $0x208] sm:$0x7]
        %v398 = vld [vmem:[%s303 + $0x210] sm:$0x7]
        %v399 = vld [vmem:[%s303 + $0x218] sm:$0x7]
        %v400 = vld [vmem:[%s303 + $0x220] sm:$0x7]
        %v401 = vld [vmem:[%s303 + $0x228] sm:$0x7]
        %v402 = vld [vmem:[%s2] sm:$0x3f]
        %404 = vset.pattern.permute.xlu0 0
        %405 = vperm.xlu0 %404, %v402
        %v406 = vpop.permute.xlu0 %405
        %vm408 = vcmask 613376
        %v410 = vsel %vm408, %v331, 0
        %vm412 = vcmask 1042432
        %v414 = vsel %vm412, %v395, 0
        %v417 = vsel %vm412, %v396, 0
        %v420 = vsel %vm412, %v397, 0
        %v423 = vsel %vm412, %v398, 0
        %v426 = vsel %vm412, %v399, 0
        %v429 = vsel %vm412, %v400, 0
        %v432 = vsel %vm412, %v401, 0
        %434 = vmatpush.msra.mxu0 0.0
        %435 = vmatpush.msra.mxu0 0.0
        %436 = vmatpush.msra.mxu0 0.0
        %437 = vmatpush.msra.mxu0 0.0
        %438 = vmatpush.msra.mxu0 0.0
        %439 = vmatpush.msra.mxu0 0.0
        %440 = vmatpush.msra.mxu0 %v414
        %441 = vmatpush.msra.mxu0 %v388
        %442 = vmatpush.msra.mxu0 %v381
        %443 = vmatpush.msra.mxu0 %v374
        %444 = vmatpush.msra.mxu0 %v367
        %445 = vmatpush.msra.mxu0 %v360
        %446 = vmatpush.msra.mxu0 %v353
        %447 = vmatpush.msra.mxu0 %v346
        %448 = vmatpush.msra.mxu0 %v339
        %449 = vmatpush.msra.mxu0 %v332
        %450 = vmatmul.f32.gmra.mxu0 %v410
        %v451 = vpop.f32.mrf.mxu0
        %v452 = vadd.f32 %v406, %v451
        %453 = vdwg.mxu0
        %454 = vmatpush.msra.mxu0 0.0
        %455 = vmatpush.msra.mxu0 0.0
        %456 = vmatpush.msra.mxu0 0.0
        %457 = vmatpush.msra.mxu0 0.0
        %458 = vmatpush.msra.mxu0 0.0
        %459 = vmatpush.msra.mxu0 0.0
        %460 = vmatpush.msra.mxu0 %v417
        %461 = vmatpush.msra.mxu0 %v389
        %462 = vmatpush.msra.mxu0 %v382
        %463 = vmatpush.msra.mxu0 %v375
        %464 = vmatpush.msra.mxu0 %v368
        %465 = vmatpush.msra.mxu0 %v361
        %466 = vmatpush.msra.mxu0 %v354
        %467 = vmatpush.msra.mxu0 %v347
        %468 = vmatpush.msra.mxu0 %v340
        %469 = vmatpush.msra.mxu0 %v333
        %470 = vmatmul.f32.gmra.mxu0 %v410
        %v471 = vpop.f32.mrf.mxu0
        %v472 = vadd.f32 %v406, %v471
        %473 = vdwg.mxu0
        %474 = vmatpush.msra.mxu0 0.0
        %475 = vmatpush.msra.mxu0 0.0
        %476 = vmatpush.msra.mxu0 0.0
        %477 = vmatpush.msra.mxu0 0.0
        %478 = vmatpush.msra.mxu0 0.0
        %479 = vmatpush.msra.mxu0 0.0
        %480 = vmatpush.msra.mxu0 %v420
        %481 = vmatpush.msra.mxu0 %v390
        %482 = vmatpush.msra.mxu0 %v383
        %483 = vmatpush.msra.mxu0 %v376
        %484 = vmatpush.msra.mxu0 %v369
        %485 = vmatpush.msra.mxu0 %v362
        %486 = vmatpush.msra.mxu0 %v355
        %487 = vmatpush.msra.mxu0 %v348
        %488 = vmatpush.msra.mxu0 %v341
        %489 = vmatpush.msra.mxu0 %v334
        %490 = vmatmul.f32.gmra.mxu0 %v410
        %v491 = vpop.f32.mrf.mxu0
        %v492 = vadd.f32 %v406, %v491
        %493 = vdwg.mxu0
        %494 = vmatpush.msra.mxu0 0.0
        %495 = vmatpush.msra.mxu0 0.0
        %496 = vmatpush.msra.mxu0 0.0
        %497 = vmatpush.msra.mxu0 0.0
        %498 = vmatpush.msra.mxu0 0.0
        %499 = vmatpush.msra.mxu0 0.0
        %500 = vmatpush.msra.mxu0 %v423
        %501 = vmatpush.msra.mxu0 %v391
        %502 = vmatpush.msra.mxu0 %v384
        %503 = vmatpush.msra.mxu0 %v377
        %504 = vmatpush.msra.mxu0 %v370
        %505 = vmatpush.msra.mxu0 %v363
        %506 = vmatpush.msra.mxu0 %v356
        %507 = vmatpush.msra.mxu0 %v349
        %508 = vmatpush.msra.mxu0 %v342
        %509 = vmatpush.msra.mxu0 %v335
        %510 = vmatmul.f32.gmra.mxu0 %v410
        %v511 = vpop.f32.mrf.mxu0
        %v512 = vadd.f32 %v406, %v511
        %513 = vdwg.mxu0
        %514 = vmatpush.msra.mxu0 0.0
        %515 = vmatpush.msra.mxu0 0.0
        %516 = vmatpush.msra.mxu0 0.0
        %517 = vmatpush.msra.mxu0 0.0
        %518 = vmatpush.msra.mxu0 0.0
        %519 = vmatpush.msra.mxu0 0.0
        %520 = vmatpush.msra.mxu0 %v426
        %521 = vmatpush.msra.mxu0 %v392
        %522 = vmatpush.msra.mxu0 %v385
        %523 = vmatpush.msra.mxu0 %v378
        %524 = vmatpush.msra.mxu0 %v371
        %525 = vmatpush.msra.mxu0 %v364
        %526 = vmatpush.msra.mxu0 %v357
        %527 = vmatpush.msra.mxu0 %v350
        %528 = vmatpush.msra.mxu0 %v343
        %529 = vmatpush.msra.mxu0 %v336
        %530 = vmatmul.f32.gmra.mxu0 %v410
        %v531 = vpop.f32.mrf.mxu0
        %v532 = vadd.f32 %v406, %v531
        %533 = vdwg.mxu0
        %534 = vmatpush.msra.mxu0 0.0
        %535 = vmatpush.msra.mxu0 0.0
        %536 = vmatpush.msra.mxu0 0.0
        %537 = vmatpush.msra.mxu0 0.0
        %538 = vmatpush.msra.mxu0 0.0
        %539 = vmatpush.msra.mxu0 0.0
        %540 = vmatpush.msra.mxu0 %v429
        %541 = vmatpush.msra.mxu0 %v393
        %542 = vmatpush.msra.mxu0 %v386
        %543 = vmatpush.msra.mxu0 %v379
        %544 = vmatpush.msra.mxu0 %v372
        %545 = vmatpush.msra.mxu0 %v365
        %546 = vmatpush.msra.mxu0 %v358
        %547 = vmatpush.msra.mxu0 %v351
        %548 = vmatpush.msra.mxu0 %v344
        %549 = vmatpush.msra.mxu0 %v337
        %550 = vmatmul.f32.gmra.mxu0 %v410
        %v551 = vpop.f32.mrf.mxu0
        %v552 = vadd.f32 %v406, %v551
        %553 = vdwg.mxu0
        %554 = vmatpush.msra.mxu0 0.0
        %555 = vmatpush.msra.mxu0 0.0
        %556 = vmatpush.msra.mxu0 0.0
        %557 = vmatpush.msra.mxu0 0.0
        %558 = vmatpush.msra.mxu0 0.0
        %559 = vmatpush.msra.mxu0 0.0
        %560 = vmatpush.msra.mxu0 %v432
        %561 = vmatpush.msra.mxu0 %v394
        %562 = vmatpush.msra.mxu0 %v387
        %563 = vmatpush.msra.mxu0 %v380
        %564 = vmatpush.msra.mxu0 %v373
        %565 = vmatpush.msra.mxu0 %v366
        %566 = vmatpush.msra.mxu0 %v359
        %567 = vmatpush.msra.mxu0 %v352
        %568 = vmatpush.msra.mxu0 %v345
        %569 = vmatpush.msra.mxu0 %v338
        %570 = vmatmul.f32.gmra.mxu0 %v410
        %v571 = vpop.f32.mrf.mxu0
        %v572 = vadd.f32 %v406, %v571
        %573 = vdwg.mxu0
        %v574 = vtanh.pop %v452
        %v575 = vtanh.pop %v472
        %v576 = vtanh.pop %v492
        %v577 = vtanh.pop %v512
        %v578 = vtanh.pop %v532
        %v579 = vtanh.pop %v552
        %v580 = vtanh.pop %v572
        %581 = vst [vmem:[%s329] sm:$0x3f] %v574
        %582 = vst [vmem:[%s329 + $0x8] sm:$0x3f] %v575
        %583 = vst [vmem:[%s329 + $0x10] sm:$0x3f] %v576
        %584 = vst [vmem:[%s329 + $0x18] sm:$0x3f] %v577
        %585 = vst [vmem:[%s329 + $0x20] sm:$0x3f] %v578
        %586 = vst [vmem:[%s329 + $0x28] sm:$0x3f] %v579
        %587 = vst [vmem:[%s329 + $0x30] sm:$0x3f] %v580
        %s588 = smul.u32 7, %s14
        %p589 = scmp.lt.s32.totalorder %s588, 13
        %s590 = scalar_select %p589, %s588, 13
        %s591 = smul.addr %s590, 8
        %s592 = scalar_lea.vmem %s3, %s591
        // Predicated region
        $region56: #{lenet_forward.3} parent=50 // pred_check
          %p593 = pneg %p100
        $region57: #{lenet_forward.3} parent=50 // pred_check_branch
          %595 = sbr.rel (%p593) target = $region59
        $region58: #{lenet_forward.3} parent=50 // pred_region
          %s596 = smul.u32 7, %s14
        $region59: #{lenet_forward.3} parent=50 // pred_fallthru
          _
      $region51: #{lenet_forward.3} parent=5 // pred_fallthru
        _
      %p597 = scmp.le.s32.totalorder 2, %s9
      // Predicated region
      $region60: #{lenet_forward.3} parent=5 // pred_check
        %p598 = pneg %p597
      $region61: #{lenet_forward.3} parent=5 // pred_check_branch
        %600 = sbr.rel (%p598) target = $region63
      $region62: #{lenet_forward.3} parent=5 // pred_region
        %s601 = ssub.s32 %s9, 2
        // Predicated region
        $region64: #{lenet_forward.3} parent=62 // pred_check
          %p602 = pneg %p106
        $region65: #{lenet_forward.3} parent=62 // pred_check_branch
          %604 = sbr.rel (%p602) target = $region67
        $region66: #{lenet_forward.3} parent=62 // pred_region
          %s605 = smul.u32 7, %s15
          %p606 = scmp.lt.s32.totalorder %s605, 13
          %s607 = scalar_select %p606, %s605, 13
          %s608 = smul.addr %s607, 8
          %s609 = scalar_lea.vmem %s3, %s608
        $region67: #{lenet_forward.3} parent=62 // pred_fallthru
          _
      $region63: #{lenet_forward.3} parent=5 // pred_fallthru
        _
    $region6: #{lenet_forward.3} parent=1 // loop_footer
      %s13 = sadd.s32 1, %s9
    $region7: #{lenet_forward.3} parent=1 // loop_footer_branch
      %8 = sbr.rel target = $region3
    $region8: #{lenet_forward.3} parent=1 // loop_exit
      _

// kernel: lenet_forward.4
$region0: #{lenet_forward.4}
  #allocation0 [shape = 'u32[]', space=smem, size = 0x4, offset = 0x4, fixed_abs, tag = 'smem constant byte address 0x4 - core index']
  #allocation1 [shape = 'u32[72,128]{1,0:T(1,128)}', space=vmem, size = 0x9000, scoped, tag = 'internal scratch']
  %s0 = inlined_call_operand.vmem [shape: f32[150,256], index: 0, kind: input, shape index: {}]
  %s1 = inlined_call_operand.vmem [shape: f32[16,150], index: 1, kind: input, shape index: {}]
  %s2 = inlined_call_operand.vmem [shape: f32[16,1], index: 2, kind: input, shape index: {}]
  %s3 = inlined_call_operand.vmem [shape: f32[16,256], index: 3, kind: output, shape index: {}]
  %s4 = sld [smem:[#allocation0]]
  $region117: #{lenet_forward.4} parent=0
    _
  %s6 = ssub.s32 1, %s4
  %s7 = scalar_select 0, %s6, %s4
  $region1: #{lenet_forward.4} parent=0
    #allocation2 [shape = 'u8[155648]{0}', space=vmem, size = 0x26000, scoped, tag = 'input window, operand 0']
    #allocation3 [shape = 'u8[16384]{0}', space=vmem, size = 0x4000, scoped, tag = 'output window, operand 0']
    loop: start=0, step=1, limit=4
    $region2: #{lenet_forward.4} parent=1 // loop_pre_header
      _
    $region3: #{lenet_forward.4} parent=1 // loop_header
      %s9 = sphi 0, %s13
      %p10 = scmp.ge.s32.totalorder %s9, 4
      %s19 = sphi 0, %s21
      %s22 = sphi 0, %s19
      %s23 = sphi 0, %s22
      %s39 = sphi 0, %s23
      %s43 = sphi 0, %s43
      %s45 = sphi 0, %s43
      %s46 = sphi 0, %s45
      %s60 = sphi 0, %s46
      %s64 = sphi 0, %s64
      %s66 = sphi 0, %s64
      %s67 = sphi 0, %s66
      %s81 = sphi 0, %s67
      %s87 = sphi 0, %s89
      %s90 = sphi 0, %s87
      %s91 = sphi 0, %s90
      %s107 = sphi 0, %s91
    $region4: #{lenet_forward.4} parent=1 // loop_header_branch
      %12 = sbr.rel (%p10) target = $region8
    $region5: #{lenet_forward.4} parent=1 // loop_body
      %s14 = ssub.s32 %s9, 1
      %s15 = ssub.s32 %s9, 2
      %s16 = sadd.s32 %s9, 1
      %s17 = ssub.s32 %s9, %s16
      %p18 = scmp.eq.s32.totalorder %s17, 0
      %s20 = sadd.s32 %s19, 1
      %s21 = scalar_select %p18, %s19, %s20
      %p24 = pneg %p18
      %p25 = scmp.eq.s32.totalorder %s9, 1
      %p26 = por %p24, %p25
      %p27 = scmp.ne.s32.totalorder %s19, %s22
      %p28 = scmp.eq.s32.totalorder %s9, 0
      %p29 = por %p27, %p28
      %p30 = scmp.ne.s32.totalorder %s19, %s22
      %p31 = scmp.eq.s32.totalorder %s14, 1
      %p32 = por %p30, %p31
      %p33 = scmp.ne.s32.totalorder %s22, %s23
      %p34 = scmp.eq.s32.totalorder %s14, 0
      %p35 = por %p33, %p34
      %p36 = scmp.ne.s32.totalorder %s22, %s23
      %p37 = scmp.eq.s32.totalorder %s15, 1
      %p38 = por %p36, %p37
      %p40 = scmp.ne.s32.totalorder %s23, %s39
      %p41 = scmp.eq.s32.totalorder %s15, 0
      %p42 = por %p40, %p41
      %s44 = sadd.s32 %s43, 1
      %p47 = scmp.eq.s32.totalorder %s9, 1
      %p48 = scmp.ne.s32.totalorder %s43, %s45
      %p49 = scmp.eq.s32.totalorder %s9, 0
      %p50 = por %p48, %p49
      %p51 = scmp.ne.s32.totalorder %s43, %s45
      %p52 = scmp.eq.s32.totalorder %s14, 1
      %p53 = por %p51, %p52
      %p54 = scmp.ne.s32.totalorder %s45, %s46
      %p55 = scmp.eq.s32.totalorder %s14, 0
      %p56 = por %p54, %p55
      %p57 = scmp.ne.s32.totalorder %s45, %s46
      %p58 = scmp.eq.s32.totalorder %s15, 1
      %p59 = por %p57, %p58
      %p61 = scmp.ne.s32.totalorder %s46, %s60
      %p62 = scmp.eq.s32.totalorder %s15, 0
      %p63 = por %p61, %p62
      %s65 = sadd.s32 %s64, 1
      %p68 = scmp.eq.s32.totalorder %s9, 1
      %p69 = scmp.ne.s32.totalorder %s64, %s66
      %p70 = scmp.eq.s32.totalorder %s9, 0
      %p71 = por %p69, %p70
      %p72 = scmp.ne.s32.totalorder %s64, %s66
      %p73 = scmp.eq.s32.totalorder %s14, 1
      %p74 = por %p72, %p73
      %p75 = scmp.ne.s32.totalorder %s66, %s67
      %p76 = scmp.eq.s32.totalorder %s14, 0
      %p77 = por %p75, %p76
      %p78 = scmp.ne.s32.totalorder %s66, %s67
      %p79 = scmp.eq.s32.totalorder %s15, 1
      %p80 = por %p78, %p79
      %p82 = scmp.ne.s32.totalorder %s67, %s81
      %p83 = scmp.eq.s32.totalorder %s15, 0
      %p84 = por %p82, %p83
      %s85 = ssub.s32 %s9, %s16
      %p86 = scmp.eq.s32.totalorder %s85, 0
      %s88 = sadd.s32 %s87, 1
      %s89 = scalar_select %p86, %s87, %s88
      %p92 = pneg %p86
      %p93 = scmp.eq.s32.totalorder %s9, 1
      %p94 = por %p92, %p93
      %p95 = scmp.ne.s32.totalorder %s87, %s90
      %p96 = scmp.eq.s32.totalorder %s9, 0
      %p97 = por %p95, %p96
      %p98 = scmp.ne.s32.totalorder %s87, %s90
      %p99 = scmp.eq.s32.totalorder %s14, 1
      %p100 = por %p98, %p99
      %p101 = scmp.ne.s32.totalorder %s90, %s91
      %p102 = scmp.eq.s32.totalorder %s14, 0
      %p103 = por %p101, %p102
      %p104 = scmp.ne.s32.totalorder %s90, %s91
      %p105 = scmp.eq.s32.totalorder %s15, 1
      %p106 = por %p104, %p105
      %p108 = scmp.ne.s32.totalorder %s91, %s107
      %p109 = scmp.eq.s32.totalorder %s15, 0
      %p110 = por %p108, %p109
      %p111 = scmp.le.s32.totalorder 1, %s9
      %p112 = scmp.lt.s32.totalorder %s9, 3
      %p113 = pnand %p111, %p112
      %p114 = pneg %p113
      // Predicated region
      $region9: #{lenet_forward.4} parent=5 // pred_check
        _
      $region10: #{lenet_forward.4} parent=5 // pred_check_branch
        %116 = sbr.rel (%p113) target = $region12
      $region11: #{lenet_forward.4} parent=5 // pred_region
        %s117 = ssub.s32 %s9, 1
        // Predicated region
        $region13: #{lenet_forward.4} parent=11 // pred_check
          %p118 = pneg %p56
        $region14: #{lenet_forward.4} parent=11 // pred_check_branch
          %120 = sbr.rel (%p118) target = $region16
        $region15: #{lenet_forward.4} parent=11 // pred_region
          _
        $region16: #{lenet_forward.4} parent=11 // pred_fallthru
          _
        // Predicated region
        $region17: #{lenet_forward.4} parent=11 // pred_check
          %p121 = pneg %p77
        $region18: #{lenet_forward.4} parent=11 // pred_check_branch
          %123 = sbr.rel (%p121) target = $region20
        $region19: #{lenet_forward.4} parent=11 // pred_region
          _
        $region20: #{lenet_forward.4} parent=11 // pred_fallthru
          _
      $region12: #{lenet_forward.4} parent=5 // pred_fallthru
        _
      %p124 = scmp.lt.s32.totalorder %s9, 2
      // Predicated region
      $region21: #{lenet_forward.4} parent=5 // pred_check
        %p125 = pneg %p124
      $region22: #{lenet_forward.4} parent=5 // pred_check_branch
        %127 = sbr.rel (%p125) target = $region24
      $region23: #{lenet_forward.4} parent=5 // pred_region
        // Predicated region
        $region25: #{lenet_forward.4} parent=23 // pred_check
          %p128 = pneg %p29
        $region26: #{lenet_forward.4} parent=23 // pred_check_branch
          %130 = sbr.rel (%p128) target = $region28
        $region27: #{lenet_forward.4} parent=23 // pred_region
          %s131 = sand.u32 %s19, 1
          %s132 = sand.u32 %s19, 1
          %s133 = smul.addr %s132, 152
          %s134 = scalar_lea.vmem [#allocation2], %s133
          %s135 = smul.addr %s9, 8
          %s136 = scalar_lea.vmem %s0, %s135
          // Predicated region
          $region29: #{lenet_forward.4} parent=27 // pred_check
            _
          $region30: #{lenet_forward.4} parent=27 // pred_check_branch
            %138 = sbr.rel (0) target = $region32
          $region31: #{lenet_forward.4} parent=27 // pred_region
            // Predicated region
            $region33: #{lenet_forward.4} parent=31 // pred_check
              _
            $region34: #{lenet_forward.4} parent=31 // pred_check_branch
              %140 = sbr.rel (0) target = $region36
            $region35: #{lenet_forward.4} parent=31 // pred_region
              // Predicated region
              $region48: #{lenet_forward.4} parent=35 // pred_check
                _
              $region49: #{lenet_forward.4} parent=35 // pred_check_branch
                %192 = sbr.rel (0) target = $region51
              $region50: #{lenet_forward.4} parent=35 // pred_region
                loop: start=0, step=1, limit=1
                $region52: #{lenet_forward.4} parent=50 // loop_pre_header
                  _
                $region53: #{lenet_forward.4} parent=50 // loop_header
                  %s194 = sphi 0, %s198
                  %p195 = scmp.ge.s32.totalorder %s194, 1
                  %s199 = sphi %s136, %s136
                  %s200 = sphi %s134, %s134
                $region54: #{lenet_forward.4} parent=50 // loop_header_branch
                  %197 = sbr.rel (%p195) target = $region58
                $region55: #{lenet_forward.4} parent=50 // loop_body
                  %v201 = vld [vmem:[%s199] sm:$0xff]
                  %202 = vst [vmem:[%s200] sm:$0xff] %v201
                  %v203 = vld [vmem:[%s199 + $0x10] sm:$0xff]
                  %204 = vst [vmem:[%s200 + $0x8] sm:$0xff] %v203
                  %v205 = vld [vmem:[%s199 + $0x20] sm:$0xff]
                  %206 = vst [vmem:[%s200 + $0x10] sm:$0xff] %v205
                  %v207 = vld [vmem:[%s199 + $0x30] sm:$0xff]
                  %208 = vst [vmem:[%s200 + $0x18] sm:$0xff] %v207
                  %v209 = vld [vmem:[%s199 + $0x40] sm:$0xff]
                  %210 = vst [vmem:[%s200 + $0x20] sm:$0xff] %v209
                  %v211 = vld [vmem:[%s199 + $0x50] sm:$0xff]
                  %212 = vst [vmem:[%s200 + $0x28] sm:$0xff] %v211
                  %v213 = vld [vmem:[%s199 + $0x60] sm:$0xff]
                  %214 = vst [vmem:[%s200 + $0x30] sm:$0xff] %v213
                  %v215 = vld [vmem:[%s199 + $0x70] sm:$0xff]
                  %216 = vst [vmem:[%s200 + $0x38] sm:$0xff] %v215
                  %v217 = vld [vmem:[%s199 + $0x80] sm:$0xff]
                  %218 = vst [vmem:[%s200 + $0x40] sm:$0xff] %v217
                  %v219 = vld [vmem:[%s199 + $0x90] sm:$0xff]
                  %220 = vst [vmem:[%s200 + $0x48] sm:$0xff] %v219
                  %v221 = vld [vmem:[%s199 + $0xa0] sm:$0xff]
                  %222 = vst [vmem:[%s200 + $0x50] sm:$0xff] %v221
                  %v223 = vld [vmem:[%s199 + $0xb0] sm:$0xff]
                  %224 = vst [vmem:[%s200 + $0x58] sm:$0xff] %v223
                  %v225 = vld [vmem:[%s199 + $0xc0] sm:$0xff]
                  %226 = vst [vmem:[%s200 + $0x60] sm:$0xff] %v225
                  %v227 = vld [vmem:[%s199 + $0xd0] sm:$0xff]
                  %228 = vst [vmem:[%s200 + $0x68] sm:$0xff] %v227
                  %v229 = vld [vmem:[%s199 + $0xe0] sm:$0xff]
                  %230 = vst [vmem:[%s200 + $0x70] sm:$0xff] %v229
                  %v231 = vld [vmem:[%s199 + $0xf0] sm:$0xff]
                  %232 = vst [vmem:[%s200 + $0x78] sm:$0xff] %v231
                  %v233 = vld [vmem:[%s199 + $0x100] sm:$0xff]
                  %234 = vst [vmem:[%s200 + $0x80] sm:$0xff] %v233
                  %v235 = vld [vmem:[%s199 + $0x110] sm:$0xff]
                  %236 = vst [vmem:[%s200 + $0x88] sm:$0xff] %v235
                  %v237 = vld [vmem:[%s199 + $0x120] sm:$0xff]
                  %238 = vst [vmem:[%s200 + $0x90] sm:$0xff] %v237
                $region56: #{lenet_forward.4} parent=50 // loop_footer
                  %s198 = sadd.s32 1, %s194
                $region57: #{lenet_forward.4} parent=50 // loop_footer_branch
                  %193 = sbr.rel target = $region53
                $region58: #{lenet_forward.4} parent=50 // loop_exit
                  _
              $region51: #{lenet_forward.4} parent=35 // pred_fallthru
                _
              // Predicated region
              $region59: #{lenet_forward.4} parent=35 // pred_check
                _
              $region60: #{lenet_forward.4} parent=35 // pred_check_branch
                %240 = sbr.rel target = $region62
              $region61: #{lenet_forward.4} parent=35 // pred_region
                _
              $region62: #{lenet_forward.4} parent=35 // pred_fallthru
                _
            $region36: #{lenet_forward.4} parent=31 // pred_fallthru
              _
            // Predicated region
            $region37: #{lenet_forward.4} parent=31 // pred_check
              _
            $region38: #{lenet_forward.4} parent=31 // pred_check_branch
              %142 = sbr.rel target = $region40
            $region39: #{lenet_forward.4} parent=31 // pred_region
              %s144 = ssub.s32 256, 1
              loop: start=0, step=1, limit=1
              $region41: #{lenet_forward.4} parent=39 // loop_pre_header
                _
              $region42: #{lenet_forward.4} parent=39 // loop_header
                %s146 = sphi 0, %s150
                %p147 = scmp.ge.s32.totalorder %s146, 1
                %s151 = sphi %s136, %s136
                %s152 = sphi %s134, %s134
              $region43: #{lenet_forward.4} parent=39 // loop_header_branch
                %149 = sbr.rel (%p147) target = $region47
              $region44: #{lenet_forward.4} parent=39 // loop_body
                %v153 = vld [vmem:[%s151] sm:%s144]
                %154 = vst [vmem:[%s152] sm:%s144] %v153
                %v155 = vld [vmem:[%s151 + $0x10] sm:%s144]
                %156 = vst [vmem:[%s152 + $0x8] sm:%s144] %v155
                %v157 = vld [vmem:[%s151 + $0x20] sm:%s144]
                %158 = vst [vmem:[%s152 + $0x10] sm:%s144] %v157
                %v159 = vld [vmem:[%s151 + $0x30] sm:%s144]
                %160 = vst [vmem:[%s152 + $0x18] sm:%s144] %v159
                %v161 = vld [vmem:[%s151 + $0x40] sm:%s144]
                %162 = vst [vmem:[%s152 + $0x20] sm:%s144] %v161
                %v163 = vld [vmem:[%s151 + $0x50] sm:%s144]
                %164 = vst [vmem:[%s152 + $0x28] sm:%s144] %v163
                %v165 = vld [vmem:[%s151 + $0x60] sm:%s144]
                %166 = vst [vmem:[%s152 + $0x30] sm:%s144] %v165
                %v167 = vld [vmem:[%s151 + $0x70] sm:%s144]
                %168 = vst [vmem:[%s152 + $0x38] sm:%s144] %v167
                %v169 = vld [vmem:[%s151 + $0x80] sm:%s144]
                %170 = vst [vmem:[%s152 + $0x40] sm:%s144] %v169
                %v171 = vld [vmem:[%s151 + $0x90] sm:%s144]
                %172 = vst [vmem:[%s152 + $0x48] sm:%s144] %v171
                %v173 = vld [vmem:[%s151 + $0xa0] sm:%s144]
                %174 = vst [vmem:[%s152 + $0x50] sm:%s144] %v173
                %v175 = vld [vmem:[%s151 + $0xb0] sm:%s144]
                %176 = vst [vmem:[%s152 + $0x58] sm:%s144] %v175
                %v177 = vld [vmem:[%s151 + $0xc0] sm:%s144]
                %178 = vst [vmem:[%s152 + $0x60] sm:%s144] %v177
                %v179 = vld [vmem:[%s151 + $0xd0] sm:%s144]
                %180 = vst [vmem:[%s152 + $0x68] sm:%s144] %v179
                %v181 = vld [vmem:[%s151 + $0xe0] sm:%s144]
                %182 = vst [vmem:[%s152 + $0x70] sm:%s144] %v181
                %v183 = vld [vmem:[%s151 + $0xf0] sm:%s144]
                %184 = vst [vmem:[%s152 + $0x78] sm:%s144] %v183
                %v185 = vld [vmem:[%s151 + $0x100] sm:%s144]
                %186 = vst [vmem:[%s152 + $0x80] sm:%s144] %v185
                %v187 = vld [vmem:[%s151 + $0x110] sm:%s144]
                %188 = vst [vmem:[%s152 + $0x88] sm:%s144] %v187
                %v189 = vld [vmem:[%s151 + $0x120] sm:%s144]
                %190 = vst [vmem:[%s152 + $0x90] sm:%s144] %v189
              $region45: #{lenet_forward.4} parent=39 // loop_footer
                %s150 = sadd.s32 1, %s146
              $region46: #{lenet_forward.4} parent=39 // loop_footer_branch
                %145 = sbr.rel target = $region42
              $region47: #{lenet_forward.4} parent=39 // loop_exit
                _
            $region40: #{lenet_forward.4} parent=31 // pred_fallthru
              _
          $region32: #{lenet_forward.4} parent=27 // pred_fallthru
            _
          %241 = vnop
        $region28: #{lenet_forward.4} parent=23 // pred_fallthru
          _
      $region24: #{lenet_forward.4} parent=5 // pred_fallthru
        _
      %p242 = scmp.le.s32.totalorder 1, %s9
      %p243 = scmp.lt.s32.totalorder %s9, 3
      %p244 = pnand %p242, %p243
      %p245 = pneg %p244
      // Predicated region
      $region63: #{lenet_forward.4} parent=5 // pred_check
        _
      $region64: #{lenet_forward.4} parent=5 // pred_check_branch
        %247 = sbr.rel (%p244) target = $region66
      $region65: #{lenet_forward.4} parent=5 // pred_region
        %s248 = ssub.s32 %s9, 1
        %s249 = sand.u32 %s22, 1
        %s250 = sand.u32 %s22, 1
        %s251 = smul.addr %s250, 152
        %s252 = scalar_lea.vmem [#allocation2], %s251
        // Predicated region
        $region67: #{lenet_forward.4} parent=65 // pred_check
          %p253 = pneg %p35
        $region68: #{lenet_forward.4} parent=65 // pred_check_branch
          %255 = sbr.rel (%p253) target = $region70
        $region69: #{lenet_forward.4} parent=65 // pred_region
          _
        $region70: #{lenet_forward.4} parent=65 // pred_fallthru
          _
        %s256 = sand.u32 %s22, 1
        %s257 = sand.u32 %s22, 1
        %s258 = smul.addr %s257, 152
        %s259 = scalar_lea.vmem [#allocation2], %s258
        %p260 = pneg %p35
        %p261 = pneg %p32
        %p262 = pneg %p56
        %p263 = pneg %p53
        %p264 = pneg %p77
        %p265 = pneg %p74
        %p266 = pneg %p103
        %p267 = pneg %p100
        %s268 = sand.u32 %s90, 1
        %s269 = sand.u32 %s90, 1
        %s270 = smul.addr %s269, 16
        %s271 = scalar_lea.vmem [#allocation3], %s270
        %v272 = vld [vmem:[%s1] sm:$0xff]
        %v273 = vld [vmem:[%s1 + $0x8] sm:$0xff]
        %v274 = vld [vmem:[%s1 + $0x10] sm:$0xff]
        %v275 = vld [vmem:[%s1 + $0x18] sm:$0xff]
        %v276 = vld [vmem:[%s252] sm:$0xff]
        %v277 = vld [vmem:[%s252 + $0x8] sm:$0xff]
        %v278 = vld [vmem:[%s252 + $0x10] sm:$0xff]
        %v279 = vld [vmem:[%s252 + $0x18] sm:$0xff]
        %v280 = vld [vmem:[%s252 + $0x20] sm:$0xff]
        %v281 = vld [vmem:[%s252 + $0x28] sm:$0xff]
        %v282 = vld [vmem:[%s252 + $0x30] sm:$0xff]
        %v283 = vld [vmem:[%s252 + $0x38] sm:$0xff]
        %v284 = vld [vmem:[%s252 + $0x40] sm:$0xff]
        %v285 = vld [vmem:[%s252 + $0x48] sm:$0xff]
        %v286 = vld [vmem:[%s252 + $0x50] sm:$0xff]
        %v287 = vld [vmem:[%s252 + $0x58] sm:$0xff]
        %v288 = vld [vmem:[%s252 + $0x60] sm:$0xff]
        %v289 = vld [vmem:[%s252 + $0x68] sm:$0xff]
        %v290 = vld [vmem:[%s252 + $0x70] sm:$0xff]
        %v291 = vld [vmem:[%s252 + $0x78] sm:$0xff]
        %v292 = vld [vmem:[%s252 + $0x80] sm:$0xff]
        %v293 = vld [vmem:[%s252 + $0x88] sm:$0xff]
        %v294 = vld [vmem:[%s252 + $0x90] sm:$0x3f]
        %v295 = vld [vmem:[%s2] sm:$0xff]
        %v296 = vld [vmem:[%s2 + $0x8] sm:$0xff]
        %298 = vset.pattern.permute.xlu0 0
        %299 = vperm.xlu0 %298, %v295
        %v300 = vpop.permute.xlu0 %299
        %303 = vset.pattern.permute.xlu0 0
        %304 = vperm.xlu0 %303, %v296
        %v305 = vpop.permute.xlu0 %304
        %vm307 = vcmask 179200
        %v309 = vsel %vm307, %v273, 0
        %v312 = vsel %vm307, %v275, 0
        %vm314 = vcmask 1045504
        %v316 = vsel %vm314, %v294, 0
        %318 = vmatpush.msra.mxu0 %v291
        %319 = vmatpush.msra.mxu0 %v290
        %320 = vmatpush.msra.mxu0 %v289
        %321 = vmatpush.msra.mxu0 %v288
        %322 = vmatpush.msra.mxu0 %v287
        %323 = vmatpush.msra.mxu0 %v286
        %324 = vmatpush.msra.mxu0 %v285
        %325 = vmatpush.msra.mxu0 %v284
        %326 = vmatpush.msra.mxu0 %v283
        %327 = vmatpush.msra.mxu0 %v282
        %328 = vmatpush.msra.mxu0 %v281
        %329 = vmatpush.msra.mxu0 %v280
        %330 = vmatpush.msra.mxu0 %v279
        %331 = vmatpush.msra.mxu0 %v278
        %332 = vmatpush.msra.mxu0 %v277
        %333 = vmatpush.msra.mxu0 %v276
        %334 = vmatmul.f32.gmra.mxu0 %v272
        %v335 = vpop.f32.mrf.mxu0
        %v336 = vadd.f32 %v300, %v335
        %337 = vmatmul.f32.gmra.mxu0 %v274
        %v338 = vpop.f32.mrf.mxu0
        %v339 = vadd.f32 %v305, %v338
        %340 = vdwg.mxu0
        %341 = vmatpush.msra.mxu0 0.0
        %342 = vmatpush.msra.mxu0 0.0
        %343 = vmatpush.msra.mxu0 0.0
        %344 = vmatpush.msra.mxu0 0.0
        %345 = vmatpush.msra.mxu0 0.0
        %346 = vmatpush.msra.mxu0 0.0
        %347 = vmatpush.msra.mxu0 0.0
        %348 = vmatpush.msra.mxu0 0.0
        %349 = vmatpush.msra.mxu0 0.0
        %350 = vmatpush.msra.mxu0 0.0
        %351 = vmatpush.msra.mxu0 0.0
        %352 = vmatpush.msra.mxu0 0.0
        %353 = vmatpush.msra.mxu0 0.0
        %354 = vmatpush.msra.mxu0 %v316
        %355 = vmatpush.msra.mxu0 %v293
        %356 = vmatpush.msra.mxu0 %v292
        %357 = vmatmul.f32.gmra.mxu0 %v309
        %v358 = vpop.f32.mrf.mxu0
        %v359 = vadd.f32 %v336, %v358
        %360 = vmatmul.f32.gmra.mxu0 %v312
        %v361 = vpop.f32.mrf.mxu0
        %v362 = vadd.f32 %v339, %v361
        %363 = vdwg.mxu0
        %v364 = vtanh.pop %v359
        %v365 = vtanh.pop %v362
        %366 = vst [vmem:[%s271] sm:$0xff] %v364
        %367 = vst [vmem:[%s271 + $0x8] sm:$0xff] %v365
        %s368 = sand.u32 %s90, 1
        %s369 = sand.u32 %s90, 1
        %s370 = smul.addr %s369, 16
        %s371 = scalar_lea.vmem [#allocation3], %s370
        // Predicated region
        $region71: #{lenet_forward.4} parent=65 // pred_check
          %p372 = pneg %p100
        $region72: #{lenet_forward.4} parent=65 // pred_check_branch
          %374 = sbr.rel (%p372) target = $region74
        $region73: #{lenet_forward.4} parent=65 // pred_region
          %s375 = smul.addr %s14, 8
          %s376 = scalar_lea.vmem %s3, %s375
          // Predicated region
          $region75: #{lenet_forward.4} parent=73 // pred_check
            _
          $region76: #{lenet_forward.4} parent=73 // pred_check_branch
            %378 = sbr.rel (0) target = $region78
          $region77: #{lenet_forward.4} parent=73 // pred_region
            // Predicated region
            $region79: #{lenet_forward.4} parent=77 // pred_check
              _
            $region80: #{lenet_forward.4} parent=77 // pred_check_branch
              %380 = sbr.rel (0) target = $region82
            $region81: #{lenet_forward.4} parent=77 // pred_region
              // Predicated region
              $region94: #{lenet_forward.4} parent=81 // pred_check
                _
              $region95: #{lenet_forward.4} parent=81 // pred_check_branch
                %398 = sbr.rel (0) target = $region97
              $region96: #{lenet_forward.4} parent=81 // pred_region
                loop: start=0, step=1, limit=1
                $region98: #{lenet_forward.4} parent=96 // loop_pre_header
                  _
                $region99: #{lenet_forward.4} parent=96 // loop_header
                  %s400 = sphi 0, %s404
                  %p401 = scmp.ge.s32.totalorder %s400, 1
                  %s405 = sphi %s371, %s371
                  %s406 = sphi %s376, %s376
                $region100: #{lenet_forward.4} parent=96 // loop_header_branch
                  %403 = sbr.rel (%p401) target = $region104
                $region101: #{lenet_forward.4} parent=96 // loop_body
                  %v407 = vld [vmem:[%s405] sm:$0xff]
                  %408 = vst [vmem:[%s406] sm:$0xff] %v407
                  %v409 = vld [vmem:[%s405 + $0x8] sm:$0xff]
                  %410 = vst [vmem:[%s406 + $0x10] sm:$0xff] %v409
                $region102: #{lenet_forward.4} parent=96 // loop_footer
                  %s404 = sadd.s32 1, %s400
                $region103: #{lenet_forward.4} parent=96 // loop_footer_branch
                  %399 = sbr.rel target = $region99
                $region104: #{lenet_forward.4} parent=96 // loop_exit
                  _
              $region97: #{lenet_forward.4} parent=81 // pred_fallthru
                _
              // Predicated region
              $region105: #{lenet_forward.4} parent=81 // pred_check
                _
              $region106: #{lenet_forward.4} parent=81 // pred_check_branch
                %412 = sbr.rel target = $region108
              $region107: #{lenet_forward.4} parent=81 // pred_region
                _
              $region108: #{lenet_forward.4} parent=81 // pred_fallthru
                _
            $region82: #{lenet_forward.4} parent=77 // pred_fallthru
              _
            // Predicated region
            $region83: #{lenet_forward.4} parent=77 // pred_check
              _
            $region84: #{lenet_forward.4} parent=77 // pred_check_branch
              %382 = sbr.rel target = $region86
            $region85: #{lenet_forward.4} parent=77 // pred_region
              %s384 = ssub.s32 256, 1
              loop: start=0, step=1, limit=1
              $region87: #{lenet_forward.4} parent=85 // loop_pre_header
                _
              $region88: #{lenet_forward.4} parent=85 // loop_header
                %s386 = sphi 0, %s390
                %p387 = scmp.ge.s32.totalorder %s386, 1
                %s391 = sphi %s371, %s371
                %s392 = sphi %s376, %s376
              $region89: #{lenet_forward.4} parent=85 // loop_header_branch
                %389 = sbr.rel (%p387) target = $region93
              $region90: #{lenet_forward.4} parent=85 // loop_body
                %v393 = vld [vmem:[%s391] sm:%s384]
                %394 = vst [vmem:[%s392] sm:%s384] %v393
                %v395 = vld [vmem:[%s391 + $0x8] sm:%s384]
                %396 = vst [vmem:[%s392 + $0x10] sm:%s384] %v395
              $region91: #{lenet_forward.4} parent=85 // loop_footer
                %s390 = sadd.s32 1, %s386
              $region92: #{lenet_forward.4} parent=85 // loop_footer_branch
                %385 = sbr.rel target = $region88
              $region93: #{lenet_forward.4} parent=85 // loop_exit
                _
            $region86: #{lenet_forward.4} parent=77 // pred_fallthru
              _
          $region78: #{lenet_forward.4} parent=73 // pred_fallthru
            _
          %413 = vnop
        $region74: #{lenet_forward.4} parent=65 // pred_fallthru
          _
      $region66: #{lenet_forward.4} parent=5 // pred_fallthru
        _
      %p414 = scmp.le.s32.totalorder 2, %s9
      // Predicated region
      $region109: #{lenet_forward.4} parent=5 // pred_check
        %p415 = pneg %p414
      $region110: #{lenet_forward.4} parent=5 // pred_check_branch
        %417 = sbr.rel (%p415) target = $region112
      $region111: #{lenet_forward.4} parent=5 // pred_region
        %s418 = ssub.s32 %s9, 2
        // Predicated region
        $region113: #{lenet_forward.4} parent=111 // pred_check
          %p419 = pneg %p106
        $region114: #{lenet_forward.4} parent=111 // pred_check_branch
          %421 = sbr.rel (%p419) target = $region116
        $region115: #{lenet_forward.4} parent=111 // pred_region
          %s422 = sand.u32 %s91, 1
          %s423 = sand.u32 %s91, 1
          %s424 = smul.addr %s423, 16
          %s425 = scalar_lea.vmem [#allocation3], %s424
        $region116: #{lenet_forward.4} parent=111 // pred_fallthru
          _
      $region112: #{lenet_forward.4} parent=5 // pred_fallthru
        _
    $region6: #{lenet_forward.4} parent=1 // loop_footer
      %s13 = sadd.s32 1, %s9
    $region7: #{lenet_forward.4} parent=1 // loop_footer_branch
      %8 = sbr.rel target = $region3
    $region8: #{lenet_forward.4} parent=1 // loop_exit
      _

// kernel: lenet_forward.5
$region0: #{lenet_forward.5}
  #allocation0 [shape = 'u32[]', space=smem, size = 0x4, offset = 0x4, fixed_abs, tag = 'smem constant byte address 0x4 - core index']
  #allocation1 [shape = 'u32[72,128]{1,0:T(1,128)}', space=vmem, size = 0x9000, scoped, tag = 'internal scratch']
  %s0 = inlined_call_operand.vmem [shape: f32[2,400], index: 0, kind: input, shape index: {}]
  %s1 = inlined_call_operand.vmem [shape: f32[400,120], index: 1, kind: input, shape index: {}]
  %s2 = inlined_call_operand.vmem [shape: f32[1,120], index: 2, kind: input, shape index: {}]
  %s3 = inlined_call_operand.vmem [shape: f32[120,84], index: 3, kind: input, shape index: {}]
  %s4 = inlined_call_operand.vmem [shape: f32[1,84], index: 4, kind: input, shape index: {}]
  %s5 = inlined_call_operand.vmem [shape: f32[84,10], index: 5, kind: input, shape index: {}]
  %s6 = inlined_call_operand.vmem [shape: f32[1,10], index: 6, kind: input, shape index: {}]
  %s7 = inlined_call_operand.hbm [shape: f32[2,10], index: 7, kind: output, shape index: {}]
  %s8 = sld [smem:[#allocation0]]
  $region38: #{lenet_forward.5} parent=0
    _
  %s10 = ssub.s32 1, %s8
  %s11 = scalar_select 0, %s10, %s8
  $region1: #{lenet_forward.5} parent=0
    #allocation2 [shape = 'u8[1024]{0}', space=vmem, size = 0x400, scoped, tag = 'output window, operand 0, single buffered']
    #allocation3 [shape = 's32[1]{0}', space=sflag, size = 0x4, scoped, tag = 'scoped memory for lenet_forward.5']
    %12 = vsyncpa [#allocation3], 0
    // Predicated region
    $region2: #{lenet_forward.5} parent=1 // pred_check
      _
    $region3: #{lenet_forward.5} parent=1 // pred_check_branch
      %14 = sbr.rel (0) target = $region5
    $region4: #{lenet_forward.5} parent=1 // pred_region
      _
    $region5: #{lenet_forward.5} parent=1 // pred_fallthru
      _
    // Predicated region
    $region6: #{lenet_forward.5} parent=1 // pred_check
      _
    $region7: #{lenet_forward.5} parent=1 // pred_check_branch
      %16 = sbr.rel (0) target = $region9
    $region8: #{lenet_forward.5} parent=1 // pred_region
      _
    $region9: #{lenet_forward.5} parent=1 // pred_fallthru
      _
    // Predicated region
    $region10: #{lenet_forward.5} parent=1 // pred_check
      _
    $region11: #{lenet_forward.5} parent=1 // pred_check_branch
      %18 = sbr.rel (0) target = $region13
    $region12: #{lenet_forward.5} parent=1 // pred_region
      _
    $region13: #{lenet_forward.5} parent=1 // pred_fallthru
      _
    // Predicated region
    $region14: #{lenet_forward.5} parent=1 // pred_check
      _
    $region15: #{lenet_forward.5} parent=1 // pred_check_branch
      %20 = sbr.rel (0) target = $region17
    $region16: #{lenet_forward.5} parent=1 // pred_region
      _
    $region17: #{lenet_forward.5} parent=1 // pred_fallthru
      _
    // Predicated region
    $region18: #{lenet_forward.5} parent=1 // pred_check
      _
    $region19: #{lenet_forward.5} parent=1 // pred_check_branch
      %22 = sbr.rel (0) target = $region21
    $region20: #{lenet_forward.5} parent=1 // pred_region
      _
    $region21: #{lenet_forward.5} parent=1 // pred_fallthru
      _
    // Predicated region
    $region22: #{lenet_forward.5} parent=1 // pred_check
      _
    $region23: #{lenet_forward.5} parent=1 // pred_check_branch
      %24 = sbr.rel (0) target = $region25
    $region24: #{lenet_forward.5} parent=1 // pred_region
      _
    $region25: #{lenet_forward.5} parent=1 // pred_fallthru
      _
    // Predicated region
    $region26: #{lenet_forward.5} parent=1 // pred_check
      _
    $region27: #{lenet_forward.5} parent=1 // pred_check_branch
      %26 = sbr.rel (0) target = $region29
    $region28: #{lenet_forward.5} parent=1 // pred_region
      _
    $region29: #{lenet_forward.5} parent=1 // pred_fallthru
      _
    %v27 = vld [vmem:[%s0] sm:$0xff]
    %v28 = vld [vmem:[%s1] sm:$0xff]
    %v29 = vld [vmem:[%s1 + $0x8] sm:$0xff]
    %v30 = vld [vmem:[%s1 + $0x10] sm:$0xff]
    %v31 = vld [vmem:[%s1 + $0x18] sm:$0xff]
    %v32 = vld [vmem:[%s1 + $0x20] sm:$0xff]
    %v33 = vld [vmem:[%s1 + $0x28] sm:$0xff]
    %v34 = vld [vmem:[%s1 + $0x30] sm:$0xff]
    %v35 = vld [vmem:[%s1 + $0x38] sm:$0xff]
    %v36 = vld [vmem:[%s1 + $0x40] sm:$0xff]
    %v37 = vld [vmem:[%s1 + $0x48] sm:$0xff]
    %v38 = vld [vmem:[%s1 + $0x50] sm:$0xff]
    %v39 = vld [vmem:[%s1 + $0x58] sm:$0xff]
    %v40 = vld [vmem:[%s1 + $0x60] sm:$0xff]
    %v41 = vld [vmem:[%s1 + $0x68] sm:$0xff]
    %v42 = vld [vmem:[%s1 + $0x70] sm:$0xff]
    %v43 = vld [vmem:[%s1 + $0x78] sm:$0xff]
    %v44 = vld [vmem:[%s1 + $0x80] sm:$0xff]
    %v45 = vld [vmem:[%s1 + $0x88] sm:$0xff]
    %v46 = vld [vmem:[%s1 + $0x90] sm:$0xff]
    %v47 = vld [vmem:[%s1 + $0x98] sm:$0xff]
    %v48 = vld [vmem:[%s1 + $0xa0] sm:$0xff]
    %v49 = vld [vmem:[%s1 + $0xa8] sm:$0xff]
    %v50 = vld [vmem:[%s1 + $0xb0] sm:$0xff]
    %v51 = vld [vmem:[%s1 + $0xb8] sm:$0xff]
    %v52 = vld [vmem:[%s1 + $0xc0] sm:$0xff]
    %v53 = vld [vmem:[%s1 + $0xc8] sm:$0xff]
    %v54 = vld [vmem:[%s1 + $0xd0] sm:$0xff]
    %v55 = vld [vmem:[%s1 + $0xd8] sm:$0xff]
    %v56 = vld [vmem:[%s1 + $0xe0] sm:$0xff]
    %v57 = vld [vmem:[%s1 + $0xe8] sm:$0xff]
    %v58 = vld [vmem:[%s1 + $0xf0] sm:$0xff]
    %v59 = vld [vmem:[%s1 + $0xf8] sm:$0xff]
    %v60 = vld [vmem:[%s1 + $0x100] sm:$0xff]
    %v61 = vld [vmem:[%s1 + $0x108] sm:$0xff]
    %v62 = vld [vmem:[%s1 + $0x110] sm:$0xff]
    %v63 = vld [vmem:[%s1 + $0x118] sm:$0xff]
    %v64 = vld [vmem:[%s1 + $0x120] sm:$0xff]
    %v65 = vld [vmem:[%s1 + $0x128] sm:$0xff]
    %v66 = vld [vmem:[%s1 + $0x130] sm:$0xff]
    %v67 = vld [vmem:[%s1 + $0x138] sm:$0xff]
    %v68 = vld [vmem:[%s1 + $0x140] sm:$0xff]
    %v69 = vld [vmem:[%s1 + $0x148] sm:$0xff]
    %v70 = vld [vmem:[%s1 + $0x150] sm:$0xff]
    %v71 = vld [vmem:[%s1 + $0x158] sm:$0xff]
    %v72 = vld [vmem:[%s1 + $0x160] sm:$0xff]
    %v73 = vld [vmem:[%s1 + $0x168] sm:$0xff]
    %v74 = vld [vmem:[%s1 + $0x170] sm:$0xff]
    %v75 = vld [vmem:[%s1 + $0x178] sm:$0xff]
    %v76 = vld [vmem:[%s1 + $0x180] sm:$0xff]
    %v77 = vld [vmem:[%s1 + $0x188] sm:$0xff]
    %v78 = vld [vmem:[%s2] sm:$0x1]
    %v80 = vperm.slane %v78, 0
    %83 = vst [vmem:[#allocation1] ss:$4 sm:$0xff] %v27
    %v84 = vld.sshfl [vmem:[#allocation1] sm:$0xff pattern:$0x73625140]
    %v85 = vld.sshfl [vmem:[#allocation1 + $0x8] sm:$0xff pattern:$0x73625140]
    %v86 = vld.sshfl [vmem:[#allocation1 + $0x10] sm:$0xff pattern:$0x73625140]
    %v87 = vld.sshfl [vmem:[#allocation1 + $0x18] sm:$0xff pattern:$0x73625140]
    %vm91 = vcmask 130048
    %v92 = vsel %vm91, %v87, 0
    %94 = vmatpush.msra.mxu0 %v43
    %95 = vmatpush.msra.mxu0 %v42
    %96 = vmatpush.msra.mxu0 %v41
    %97 = vmatpush.msra.mxu0 %v40
    %98 = vmatpush.msra.mxu0 %v39
    %99 = vmatpush.msra.mxu0 %v38
    %100 = vmatpush.msra.mxu0 %v37
    %101 = vmatpush.msra.mxu0 %v36
    %102 = vmatpush.msra.mxu0 %v35
    %103 = vmatpush.msra.mxu0 %v34
    %104 = vmatpush.msra.mxu0 %v33
    %105 = vmatpush.msra.mxu0 %v32
    %106 = vmatpush.msra.mxu0 %v31
    %107 = vmatpush.msra.mxu0 %v30
    %108 = vmatpush.msra.mxu0 %v29
    %109 = vmatpush.msra.mxu0 %v28
    %110 = vmatmul.f32.gmra.mxu0 %v84
    %v111 = vpop.f32.mrf.mxu0
    %v112 = vadd.f32 %v80, %v111
    %113 = vdwg.mxu0
    %114 = vmatpush.msra.mxu0 %v59
    %115 = vmatpush.msra.mxu0 %v58
    %116 = vmatpush.msra.mxu0 %v57
    %117 = vmatpush.msra.mxu0 %v56
    %118 = vmatpush.msra.mxu0 %v55
    %119 = vmatpush.msra.mxu0 %v54
    %120 = vmatpush.msra.mxu0 %v53
    %121 = vmatpush.msra.mxu0 %v52
    %122 = vmatpush.msra.mxu0 %v51
    %123 = vmatpush.msra.mxu0 %v50
    %124 = vmatpush.msra.mxu0 %v49
    %125 = vmatpush.msra.mxu0 %v48
    %126 = vmatpush.msra.mxu0 %v47
    %127 = vmatpush.msra.mxu0 %v46
    %128 = vmatpush.msra.mxu0 %v45
    %129 = vmatpush.msra.mxu0 %v44
    %130 = vmatmul.f32.gmra.mxu0 %v85
    %v131 = vpop.f32.mrf.mxu0
    %v132 = vadd.f32 %v112, %v131
    %133 = vdwg.mxu0
    %134 = vmatpush.msra.mxu0 %v75
    %135 = vmatpush.msra.mxu0 %v74
    %136 = vmatpush.msra.mxu0 %v73
    %137 = vmatpush.msra.mxu0 %v72
    %138 = vmatpush.msra.mxu0 %v71
    %139 = vmatpush.msra.mxu0 %v70
    %140 = vmatpush.msra.mxu0 %v69
    %141 = vmatpush.msra.mxu0 %v68
    %142 = vmatpush.msra.mxu0 %v67
    %143 = vmatpush.msra.mxu0 %v66
    %144 = vmatpush.msra.mxu0 %v65
    %145 = vmatpush.msra.mxu0 %v64
    %146 = vmatpush.msra.mxu0 %v63
    %147 = vmatpush.msra.mxu0 %v62
    %148 = vmatpush.msra.mxu0 %v61
    %149 = vmatpush.msra.mxu0 %v60
    %150 = vmatmul.f32.gmra.mxu0 %v86
    %v151 = vpop.f32.mrf.mxu0
    %v152 = vadd.f32 %v132, %v151
    %153 = vdwg.mxu0
    %154 = vmatpush.msra.mxu0 0.0
    %155 = vmatpush.msra.mxu0 0.0
    %156 = vmatpush.msra.mxu0 0.0
    %157 = vmatpush.msra.mxu0 0.0
    %158 = vmatpush.msra.mxu0 0.0
    %159 = vmatpush.msra.mxu0 0.0
    %160 = vmatpush.msra.mxu0 0.0
    %161 = vmatpush.msra.mxu0 0.0
    %162 = vmatpush.msra.mxu0 0.0
    %163 = vmatpush.msra.mxu0 0.0
    %164 = vmatpush.msra.mxu0 0.0
    %165 = vmatpush.msra.mxu0 0.0
    %166 = vmatpush.msra.mxu0 0.0
    %167 = vmatpush.msra.mxu0 0.0
    %168 = vmatpush.msra.mxu0 %v77
    %169 = vmatpush.msra.mxu0 %v76
    %170 = vmatmul.f32.gmra.mxu0 %v92
    %v171 = vpop.f32.mrf.mxu0
    %v172 = vadd.f32 %v152, %v171
    %173 = vdwg.mxu0
    %v174 = vtanh.pop %v172
    %v175 = vld [vmem:[%s3] sm:$0xff]
    %v176 = vld [vmem:[%s3 + $0x8] sm:$0xff]
    %v177 = vld [vmem:[%s3 + $0x10] sm:$0xff]
    %v178 = vld [vmem:[%s3 + $0x18] sm:$0xff]
    %v179 = vld [vmem:[%s3 + $0x20] sm:$0xff]
    %v180 = vld [vmem:[%s3 + $0x28] sm:$0xff]
    %v181 = vld [vmem:[%s3 + $0x30] sm:$0xff]
    %v182 = vld [vmem:[%s3 + $0x38] sm:$0xff]
    %v183 = vld [vmem:[%s3 + $0x40] sm:$0xff]
    %v184 = vld [vmem:[%s3 + $0x48] sm:$0xff]
    %v185 = vld [vmem:[%s3 + $0x50] sm:$0xff]
    %v186 = vld [vmem:[%s3 + $0x58] sm:$0xff]
    %v187 = vld [vmem:[%s3 + $0x60] sm:$0xff]
    %v188 = vld [vmem:[%s3 + $0x68] sm:$0xff]
    %v189 = vld [vmem:[%s3 + $0x70] sm:$0xff]
    %v190 = vld [vmem:[%s4] sm:$0x1]
    %v192 = vperm.slane %v190, 0
    %vm194 = vcmask 982016
    %v196 = vsel %vm194, %v174, 0
    %198 = vmatpush.msra.mxu0 0.0
    %199 = vmatpush.msra.mxu0 %v189
    %200 = vmatpush.msra.mxu0 %v188
    %201 = vmatpush.msra.mxu0 %v187
    %202 = vmatpush.msra.mxu0 %v186
    %203 = vmatpush.msra.mxu0 %v185
    %204 = vmatpush.msra.mxu0 %v184
    %205 = vmatpush.msra.mxu0 %v183
    %206 = vmatpush.msra.mxu0 %v182
    %207 = vmatpush.msra.mxu0 %v181
    %208 = vmatpush.msra.mxu0 %v180
    %209 = vmatpush.msra.mxu0 %v179
    %210 = vmatpush.msra.mxu0 %v178
    %211 = vmatpush.msra.mxu0 %v177
    %212 = vmatpush.msra.mxu0 %v176
    %213 = vmatpush.msra.mxu0 %v175
    %214 = vmatmul.f32.gmra.mxu0 %v196
    %v215 = vpop.f32.mrf.mxu0
    %v216 = vadd.f32 %v192, %v215
    %217 = vdwg.mxu0
    %v218 = vtanh.pop %v216
    %v219 = vld [vmem:[%s5] sm:$0xff]
    %v220 = vld [vmem:[%s5 + $0x8] sm:$0xff]
    %v221 = vld [vmem:[%s5 + $0x10] sm:$0xff]
    %v222 = vld [vmem:[%s5 + $0x18] sm:$0xff]
    %v223 = vld [vmem:[%s5 + $0x20] sm:$0xff]
    %v224 = vld [vmem:[%s5 + $0x28] sm:$0xff]
    %v225 = vld [vmem:[%s5 + $0x30] sm:$0xff]
    %v226 = vld [vmem:[%s5 + $0x38] sm:$0xff]
    %v227 = vld [vmem:[%s5 + $0x40] sm:$0xff]
    %v228 = vld [vmem:[%s5 + $0x48] sm:$0xff]
    %v229 = vld [vmem:[%s5 + $0x50] sm:$0xf]
    %v230 = vld [vmem:[%s6] sm:$0x1]
    %v232 = vperm.slane %v230, 0
    %vm234 = vcmask 687104
    %v236 = vsel %vm234, %v218, 0
    %vm238 = vcmask 1043456
    %v240 = vsel %vm238, %v229, 0
    %242 = vmatpush.msra.mxu0 0.0
    %243 = vmatpush.msra.mxu0 0.0
    %244 = vmatpush.msra.mxu0 0.0
    %245 = vmatpush.msra.mxu0 0.0
    %246 = vmatpush.msra.mxu0 0.0
    %247 = vmatpush.msra.mxu0 %v240
    %248 = vmatpush.msra.mxu0 %v228
    %249 = vmatpush.msra.mxu0 %v227
    %250 = vmatpush.msra.mxu0 %v226
    %251 = vmatpush.msra.mxu0 %v225
    %252 = vmatpush.msra.mxu0 %v224
    %253 = vmatpush.msra.mxu0 %v223
    %254 = vmatpush.msra.mxu0 %v222
    %255 = vmatpush.msra.mxu0 %v221
    %256 = vmatpush.msra.mxu0 %v220
    %257 = vmatpush.msra.mxu0 %v219
    %258 = vmatmul.f32.gmra.mxu0 %v236
    %v259 = vpop.f32.mrf.mxu0
    %v260 = vadd.f32 %v232, %v259
    %261 = vdwg.mxu0
    %vm262 = vcmask 74752
    %263 = vst.msk [vmem:[#allocation2] sm:$0x3] %vm262, %v260
    // Predicated region
    $region30: #{lenet_forward.5} parent=1 // pred_check
      _
    $region31: #{lenet_forward.5} parent=1 // pred_check_branch
      %265 = sbr.rel (0) target = $region33
    $region32: #{lenet_forward.5} parent=1 // pred_region
      %267 = vsyncadd [#allocation3], 0
      %s269 = sshll.u32 [#allocation2], 4
      %s270 = int_to_ptr.vmem [resolvable:$true] %s269
      %s271 = sshll.u32 %s7, 4
      %s272 = int_to_ptr.hbm [resolvable:$true] %s271
      %274 = dma.vmem_to_hbm [thread:$0]  %s270, 32, %s272, [#allocation3]
    $region33: #{lenet_forward.5} parent=1 // pred_fallthru
      _
    // Predicated region
    $region34: #{lenet_forward.5} parent=1 // pred_check
      _
    $region35: #{lenet_forward.5} parent=1 // pred_check_branch
      %276 = sbr.rel (0) target = $region37
    $region36: #{lenet_forward.5} parent=1 // pred_region
      %278 = dma.done [#allocation3], 32
    $region37: #{lenet_forward.5} parent=1 // pred_fallthru
      _
    %279 = vsyncpa [#allocation3], 1

</llo_original>
